<compile_context>
chip_gen: v5e
topology: v5e:2x2
jax: 0.10.0
libtpu: 0.0.40
codegen_flags: <defaults>
</compile_context>

<pallas_src>
import functools

import numpy as np
import jax
import jax.numpy as jnp
from jax import lax
from jax.experimental import pallas as pl
from jax.experimental.pallas import tpu as pltpu

# Deterministic SW parameters (values from StillingerWeberLayer.__init__).
SW_PARAMS = dict(
    A=15.2848479197914, B=0.6022245584, p=4.0, q=0.0,
    sigma=2.0951, gamma=2.51412, cutoff=3.77118,
    lam=45.5322, cos_beta0=-0.333333333333333,
)
_PARAM_ORDER = ("A", "B", "p", "q", "sigma", "gamma", "cutoff", "lam", "cos_beta0")

BA = 128          # atoms per grid block (lane-axis width)
_EPS_CUT = 1e-3   # clamp on (r - cutoff): exp() already underflows there, avoids 0*inf


def _sw_kernel(cent_ref, nslab_ref, outc_ref, outn_ref):
    f32 = jnp.float32
    A = SW_PARAMS["A"]
    B = SW_PARAMS["B"]
    sigma = SW_PARAMS["sigma"]
    gamma = SW_PARAMS["gamma"]
    cutoff = SW_PARAMS["cutoff"]
    lam = SW_PARAMS["lam"]
    cb0 = SW_PARAMS["cos_beta0"]
    # p = 4, q = 0 are specialized algebraically below.

    M = nslab_ref.shape[0] // 4
    ba = nslab_ref.shape[1]
    cut2 = cutoff * cutoff
    r_safe2 = (0.5 * cutoff) ** 2

    cent = cent_ref[...]                       # (8, BA)
    contrib = cent[0:1, :]
    cx = cent[1:2, :]
    cy = cent[2:3, :]
    cz = cent[3:4, :]

    nxv = nslab_ref[0:M, :]                    # (M, BA)
    nyv = nslab_ref[M:2 * M, :]
    nzv = nslab_ref[2 * M:3 * M, :]
    maskv = nslab_ref[3 * M:4 * M, :]

    dx = nxv - cx
    dy = nyv - cy
    dz = nzv - cz
    r2 = dx * dx + dy * dy + dz * dz
    valid = (maskv > 0.5) & (r2 < cut2) & (contrib > 0.5)
    vm = valid.astype(f32)
    r2s = jnp.where(valid, r2, r_safe2)        # safe radius (< cutoff) for masked slots
    inv_r = lax.rsqrt(r2s)
    rs = r2s * inv_r
    ux = dx * inv_r
    uy = dy * inv_r
    uz = dz * inv_r

    inv_rc = 1.0 / jnp.minimum(rs - cutoff, -_EPS_CUT)    # 1/(r - cutoff), finite

    # ---------------- two-body (p = 4, q = 0 specialized) ----------------
    sr = sigma * inv_r
    sr2 = sr * sr
    s_p = sr2 * sr2                            # (sigma/r)^4
    phi = B * s_p - 1.0                        # B*(s/r)^p - (s/r)^q, q = 0
    expf = jnp.exp(sigma * inv_rc)
    e2 = (A * phi) * expf * vm
    de2 = A * expf * (-(4.0 * B) * s_p * inv_r
                      - (phi * sigma) * inv_rc * inv_rc) * vm     # dE2/dr

    # ---------------- three-body: loop over the k slot ----------------
    ej = jnp.exp(gamma * inv_rc) * vm          # per-neighbor exp factor (carries j mask)
    rs2 = rs * rs
    half_ir = 0.5 * inv_r
    gam_irc2 = gamma * inv_rc * inv_rc
    jiota = lax.broadcasted_iota(jnp.int32, (M, 1), 0)
    zeros = jnp.zeros((M, ba), f32)

    def pair_body(k, carry):
        sjj, wx, wy, wz, e3a = carry
        nkx = nslab_ref[pl.ds(k, 1), :]                    # (1, BA)
        nky = nslab_ref[pl.ds(M + k, 1), :]
        nkz = nslab_ref[pl.ds(2 * M + k, 1), :]
        mk = nslab_ref[pl.ds(3 * M + k, 1), :]
        dkx = nkx - cx
        dky = nky - cy
        dkz = nkz - cz
        rk2 = dkx * dkx + dky * dky + dkz * dkz
        validk = (mk > 0.5) & (rk2 < cut2)
        rk2s = jnp.where(validk, rk2, r_safe2)
        irk = lax.rsqrt(rk2s)
        rk = rk2s * irk
        ejk = jnp.exp(gamma / jnp.minimum(rk - cutoff, -_EPS_CUT)) * validk.astype(f32)

        djx = nkx - nxv                                    # x_k - x_j  (M, BA)
        djy = nky - nyv
        djz = nkz - nzv
        rjk2 = djx * djx + djy * djy + djz * djz
        cosb = (rs2 + rk * rk - rjk2) * half_ir * irk
        cd = cosb - cb0
        notk = (jiota != k).astype(f32)                    # exclude j == k
        lgcd = (lam * cd) * (ej * ejk) * notk              # lam * g * cd * pair_mask
        e3a = e3a + lgcd * cd
        sjj = sjj + lgcd * (2.0 * (irk - cosb * inv_r) - gam_irc2 * cd)
        w = (2.0 * lgcd) * inv_r * irk                     # rjk cancels analytically
        wx = wx + w * djx
        wy = wy + w * djy
        wz = wz + w * djz
        return sjj, wx, wy, wz, e3a

    unroll = True if M <= 16 else 4
    sjj, wx, wy, wz, e3a = lax.fori_loop(
        0, M, pair_body, (zeros, zeros, zeros, zeros, zeros), unroll=unroll)

    # ---------------- assemble forces / energy ----------------
    coef = 0.5 * de2 + sjj                     # radial dE/dr_ij per neighbor slot
    gnx = coef * ux + wx                       # dE/dx_neighbor
    gny = coef * uy + wy
    gnz = coef * uz + wz
    fix = jnp.sum(coef * ux, axis=0, keepdims=True)   # force on central atom = -dE/dx_i
    fiy = jnp.sum(coef * uy, axis=0, keepdims=True)
    fiz = jnp.sum(coef * uz, axis=0, keepdims=True)
    e_at = 0.5 * (jnp.sum(e2, axis=0, keepdims=True)
                  + jnp.sum(e3a, axis=0, keepdims=True))

    outc_ref[...] = jnp.concatenate(
        [fix, fiy, fiz, e_at, jnp.zeros((4, ba), f32)], axis=0)
    outn_ref[0:M, :] = -gnx                    # forces = grad(-E)
    outn_ref[M:2 * M, :] = -gny
    outn_ref[2 * M:3 * M, :] = -gnz


def _dense_neighbors(particle_contributing, num_neighbors, neighbor_list, max_neigh):
    """Ragged packed neighbor list -> dense (N, max_neigh) table + mask.

    Matches the PyTorch loop: the cursor only advances for contributing atoms.
    """
    contrib = (particle_contributing == 1)
    eff_nn = jnp.where(contrib, num_neighbors, 0).astype(jnp.int32)
    offsets = jnp.cumsum(eff_nn) - eff_nn
    slots = jnp.arange(max_neigh, dtype=jnp.int32)[None, :]
    in_range = slots < eff_nn[:, None]
    gidx = jnp.clip(offsets[:, None] + slots, 0, neighbor_list.shape[0] - 1)
    neigh_idx = jnp.where(in_range, neighbor_list[gidx], 0).astype(jnp.int32)
    mask = in_range.astype(jnp.float32)
    return contrib.astype(jnp.float32), neigh_idx, mask


@functools.partial(jax.jit, static_argnames=("max_neigh",))
def sw_forward(particle_contributing, coords, num_neighbors, neighbor_list, max_neigh):
    n_atoms = particle_contributing.shape[0]
    M = ((max(1, int(max_neigh)) + 7) // 8) * 8            # neighbor slots, sublane pad
    coords3 = coords.reshape(n_atoms, 3).astype(jnp.float32)
    contrib_f, neigh_idx, mask = _dense_neighbors(
        particle_contributing, num_neighbors, neighbor_list, M)
    ncoords = coords3[neigh_idx]                           # (N, M, 3)

    npad = ((n_atoms + BA - 1) // BA) * BA
    pad_a = npad - n_atoms

    def padl(a):                                           # pad the atom (lane) axis
        return jnp.pad(a, ((0, 0), (0, pad_a)))

    cent = jnp.concatenate(
        [padl(jnp.stack([contrib_f, coords3[:, 0], coords3[:, 1], coords3[:, 2]],
                        axis=0)),
         jnp.zeros((4, npad), jnp.float32)], axis=0)       # (8, npad)
    nslab = padl(jnp.concatenate(
        [ncoords[:, :, 0].T, ncoords[:, :, 1].T, ncoords[:, :, 2].T, mask.T],
        axis=0))                                           # (4*M, npad)

    outc, outn = pl.pallas_call(
        _sw_kernel,
        grid=(npad // BA,),
        in_specs=(pl.BlockSpec((8, BA), lambda i: (0, i)),
                  pl.BlockSpec((4 * M, BA), lambda i: (0, i))),
        out_specs=(pl.BlockSpec((8, BA), lambda i: (0, i)),
                   pl.BlockSpec((3 * M, BA), lambda i: (0, i))),
        out_shape=(jax.ShapeDtypeStruct((8, npad), jnp.float32),
                   jax.ShapeDtypeStruct((3 * M, npad), jnp.float32)),
        compiler_params=pltpu.CompilerParams(
            dimension_semantics=("parallel",)),
    )(cent, nslab)

    ener = jnp.sum(outc[3, :n_atoms])                      # per-atom partials -> scalar
    f_self = outc[0:3, :n_atoms].T                         # (N, 3) force on central atoms
    f_neigh = jnp.stack([outn[0:M, :n_atoms].T,
                         outn[M:2 * M, :n_atoms].T,
                         outn[2 * M:3 * M, :n_atoms].T], axis=-1)   # (N, M, 3)
    forces = f_self.at[neigh_idx.reshape(-1)].add(f_neigh.reshape(-1, 3))
    return ener, forces.reshape(-1)


# ----------------------- pure-JAX reference (for validation) -----------------------
def ref_energy_dense(coords_flat, contrib_f, neigh_idx, mask):
    A, B, p, q, sigma, gamma, cutoff, lam, cb0 = [
        jnp.float32(SW_PARAMS[k]) for k in _PARAM_ORDER]
    c3 = coords_flat.reshape(-1, 3)
    xi = c3[:, None, :]
    xn = c3[neigh_idx]
    d = xn - xi
    r2 = jnp.sum(d * d, axis=-1)
    valid = (mask > 0.5) & (r2 < cutoff * cutoff) & (contrib_f[:, None] > 0.5)
    rs = jnp.sqrt(jnp.where(valid, r2, (0.5 * cutoff) ** 2))
    sr = sigma / rs
    e2 = A * (B * sr ** p - sr ** q) * jnp.exp(sigma / (rs - cutoff))
    e2 = jnp.where(valid, e2, 0.0)
    djk = xn[:, None, :, :] - xn[:, :, None, :]
    rjk2 = jnp.sum(djk * djk, axis=-1)
    mslots = mask.shape[1]
    eye = jnp.eye(mslots, dtype=bool)[None]
    pv = valid[:, :, None] & valid[:, None, :] & (~eye)
    rj = rs[:, :, None]
    rk = rs[:, None, :]
    cosb = (rj * rj + rk * rk - rjk2) / (2.0 * rj * rk)
    g = jnp.exp(gamma / (rj - cutoff) + gamma / (rk - cutoff))
    e3 = jnp.where(pv, lam * g * (cosb - cb0) ** 2, 0.0)
    return 0.5 * (jnp.sum(e2) + jnp.sum(e3))


if __name__ == "__main__":
    key = jax.random.PRNGKey(0)

    # Small jittered 3x2x2 lattice of 12 atoms (Si-ish spacing), last 2 non-contributing.
    gx, gy, gz = jnp.meshgrid(jnp.arange(3), jnp.arange(2), jnp.arange(2), indexing="ij")
    base = jnp.stack([gx, gy, gz], axis=-1).reshape(-1, 3).astype(jnp.float32) * 2.5
    jitter = jax.random.uniform(key, base.shape, minval=-0.4, maxval=0.4, dtype=jnp.float32)
    coords3 = base + jitter
    n_atoms = coords3.shape[0]
    particle_contributing = jnp.array([1] * (n_atoms - 2) + [0] * 2, dtype=jnp.int32)
    coords = coords3.reshape(-1)

    # Build packed ragged neighbor list on host (KIM-style: entries only for contributing atoms).
    cutoff = SW_PARAMS["cutoff"]
    cnp = np.asarray(coords3)
    contrib_np = np.asarray(particle_contributing)
    nn, nlist = [], []
    for i in range(n_atoms):
        if contrib_np[i] != 1:
            nn.append(0)
            continue
        dist = np.linalg.norm(cnp - cnp[i], axis=1)
        neigh = [j for j in range(n_atoms) if j != i and dist[j] < cutoff]
        nn.append(len(neigh))
        nlist.extend(neigh)
    num_neighbors = jnp.array(nn, dtype=jnp.int32)
    neighbor_list = jnp.array(nlist if nlist else [0], dtype=jnp.int32)
    max_neigh = max(1, max(nn))

    energy_k, forces_k = sw_forward(particle_contributing, coords, num_neighbors,
                                    neighbor_list, max_neigh)
    jax.block_until_ready((energy_k, forces_k))

    # Validate against a pure-JAX reference (energy) and its autodiff gradient (forces).
    maxn_pad = ((max_neigh + 7) // 8) * 8
    contrib_f, neigh_idx, mask = _dense_neighbors(
        particle_contributing, num_neighbors, neighbor_list, maxn_pad)
    e_ref = ref_energy_dense(coords, contrib_f, neigh_idx, mask)
    f_ref = -jax.grad(ref_energy_dense)(coords, contrib_f, neigh_idx, mask)

    scale_e = max(1.0, float(jnp.abs(e_ref)))
    scale_f = max(1.0, float(jnp.max(jnp.abs(f_ref))))
    np.testing.assert_allclose(float(energy_k), float(e_ref),
                               rtol=5e-3, atol=5e-4 * scale_e)
    np.testing.assert_allclose(np.asarray(forces_k), np.asarray(f_ref),
                               rtol=5e-3, atol=5e-4 * scale_f)

    print("KERNEL_OK")
</pallas_src>

<mosaic_0001>
module attributes {stable_mosaic.version = 11 : i64} {
  func.func @_sw_kernel(%arg0: i32, %arg1: memref<8x128xf32, #tpu.memory_space<vmem>>, %arg2: memref<32x128xf32, #tpu.memory_space<vmem>>, %arg3: memref<8x128xf32, #tpu.memory_space<vmem>>, %arg4: memref<24x128xf32, #tpu.memory_space<vmem>>) attributes {dimension_semantics = [#tpu.dimension_semantics<parallel>], iteration_bounds = array<i64: 1>, scalar_prefetch = 0 : i64, scratch_operands = 0 : i64, tpu.core_type = #tpu.core_type<tc>, window_params = [{transform_indices = @transform_0, window_bounds = array<i64: 8, 128>}, {transform_indices = @transform_1, window_bounds = array<i64: 32, 128>}, {transform_indices = @transform_2, window_bounds = array<i64: 8, 128>}, {transform_indices = @transform_3, window_bounds = array<i64: 24, 128>}]} {
    %c0 = arith.constant 0 : index
    %c0_0 = arith.constant 0 : index
    %0 = vector.load %arg1[%c0, %c0_0] : memref<8x128xf32, #tpu.memory_space<vmem>>, vector<8x128xf32>
    %1 = vector.extract_strided_slice %0 {offsets = [0, 0], sizes = [1, 128], strides = [1, 1]} : vector<8x128xf32> to vector<1x128xf32>
    %2 = vector.extract_strided_slice %0 {offsets = [1, 0], sizes = [1, 128], strides = [1, 1]} : vector<8x128xf32> to vector<1x128xf32>
    %3 = vector.extract_strided_slice %0 {offsets = [2, 0], sizes = [1, 128], strides = [1, 1]} : vector<8x128xf32> to vector<1x128xf32>
    %4 = vector.extract_strided_slice %0 {offsets = [3, 0], sizes = [1, 128], strides = [1, 1]} : vector<8x128xf32> to vector<1x128xf32>
    %c0_1 = arith.constant 0 : index
    %c0_2 = arith.constant 0 : index
    %5 = vector.load %arg2[%c0_1, %c0_2] : memref<32x128xf32, #tpu.memory_space<vmem>>, vector<8x128xf32>
    %c8 = arith.constant 8 : index
    %c0_3 = arith.constant 0 : index
    %6 = vector.load %arg2[%c8, %c0_3] : memref<32x128xf32, #tpu.memory_space<vmem>>, vector<8x128xf32>
    %c16 = arith.constant 16 : index
    %c0_4 = arith.constant 0 : index
    %7 = vector.load %arg2[%c16, %c0_4] : memref<32x128xf32, #tpu.memory_space<vmem>>, vector<8x128xf32>
    %c24 = arith.constant 24 : index
    %c0_5 = arith.constant 0 : index
    %8 = vector.load %arg2[%c24, %c0_5] : memref<32x128xf32, #tpu.memory_space<vmem>>, vector<8x128xf32>
    %9 = vector.broadcast %2 : vector<1x128xf32> to vector<8x128xf32>
    %10 = arith.subf %5, %9 : vector<8x128xf32>
    %11 = vector.broadcast %3 : vector<1x128xf32> to vector<8x128xf32>
    %12 = arith.subf %6, %11 : vector<8x128xf32>
    %13 = vector.broadcast %4 : vector<1x128xf32> to vector<8x128xf32>
    %14 = arith.subf %7, %13 : vector<8x128xf32>
    %15 = arith.mulf %10, %10 : vector<8x128xf32>
    %16 = arith.mulf %12, %12 : vector<8x128xf32>
    %17 = arith.addf %15, %16 : vector<8x128xf32>
    %18 = arith.mulf %14, %14 : vector<8x128xf32>
    %19 = arith.addf %17, %18 : vector<8x128xf32>
    %cst = arith.constant 5.000000e-01 : f32
    %20 = vector.broadcast %cst : f32 to vector<8x128xf32>
    %21 = arith.cmpf ogt, %8, %20 : vector<8x128xf32>
    %cst_6 = arith.constant 14.2217989 : f32
    %22 = vector.broadcast %cst_6 : f32 to vector<8x128xf32>
    %23 = arith.cmpf olt, %19, %22 : vector<8x128xf32>
    %24 = arith.andi %21, %23 : vector<8x128xi1>
    %cst_7 = arith.constant 5.000000e-01 : f32
    %25 = vector.broadcast %cst_7 : f32 to vector<1x128xf32>
    %26 = arith.cmpf ogt, %1, %25 : vector<1x128xf32>
    %27 = vector.broadcast %26 : vector<1x128xi1> to vector<8x128xi1>
    %28 = arith.andi %24, %27 : vector<8x128xi1>
    %29 = arith.extui %28 : vector<8x128xi1> to vector<8x128xi32>
    %30 = arith.sitofp %29 : vector<8x128xi32> to vector<8x128xf32>
    %cst_8 = arith.constant 3.55544972 : f32
    %31 = vector.broadcast %cst_8 : f32 to vector<8x128xf32>
    %32 = arith.select %28, %19, %31 : vector<8x128xi1>, vector<8x128xf32>
    %33 = math.rsqrt %32 : vector<8x128xf32>
    %34 = arith.mulf %32, %33 : vector<8x128xf32>
    %35 = arith.mulf %10, %33 : vector<8x128xf32>
    %36 = arith.mulf %12, %33 : vector<8x128xf32>
    %37 = arith.mulf %14, %33 : vector<8x128xf32>
    %cst_9 = arith.constant 3.771180e+00 : f32
    %38 = vector.broadcast %cst_9 : f32 to vector<8x128xf32>
    %39 = arith.subf %34, %38 : vector<8x128xf32>
    %cst_10 = arith.constant -1.000000e-03 : f32
    %40 = vector.broadcast %cst_10 : f32 to vector<8x128xf32>
    %41 = arith.minimumf %39, %40 : vector<8x128xf32>
    %cst_11 = arith.constant 1.000000e+00 : f32
    %42 = vector.broadcast %cst_11 : f32 to vector<8x128xf32>
    %43 = arith.divf %42, %41 : vector<8x128xf32>
    %cst_12 = arith.constant 2.095100e+00 : f32
    %44 = vector.broadcast %cst_12 : f32 to vector<8x128xf32>
    %45 = arith.mulf %44, %33 : vector<8x128xf32>
    %46 = arith.mulf %45, %45 : vector<8x128xf32>
    %47 = arith.mulf %46, %46 : vector<8x128xf32>
    %cst_13 = arith.constant 0.602224529 : f32
    %48 = vector.broadcast %cst_13 : f32 to vector<8x128xf32>
    %49 = arith.mulf %48, %47 : vector<8x128xf32>
    %cst_14 = arith.constant 1.000000e+00 : f32
    %50 = vector.broadcast %cst_14 : f32 to vector<8x128xf32>
    %51 = arith.subf %49, %50 : vector<8x128xf32>
    %cst_15 = arith.constant 2.095100e+00 : f32
    %52 = vector.broadcast %cst_15 : f32 to vector<8x128xf32>
    %53 = arith.mulf %52, %43 : vector<8x128xf32>
    %54 = math.exp %53 : vector<8x128xf32>
    %cst_16 = arith.constant 15.2848482 : f32
    %55 = vector.broadcast %cst_16 : f32 to vector<8x128xf32>
    %56 = arith.mulf %55, %51 : vector<8x128xf32>
    %57 = arith.mulf %56, %54 : vector<8x128xf32>
    %58 = arith.mulf %57, %30 : vector<8x128xf32>
    %cst_17 = arith.constant 15.2848482 : f32
    %59 = vector.broadcast %cst_17 : f32 to vector<8x128xf32>
    %60 = arith.mulf %59, %54 : vector<8x128xf32>
    %cst_18 = arith.constant -2.40889812 : f32
    %61 = vector.broadcast %cst_18 : f32 to vector<8x128xf32>
    %62 = arith.mulf %61, %47 : vector<8x128xf32>
    %63 = arith.mulf %62, %33 : vector<8x128xf32>
    %cst_19 = arith.constant 2.095100e+00 : f32
    %64 = vector.broadcast %cst_19 : f32 to vector<8x128xf32>
    %65 = arith.mulf %51, %64 : vector<8x128xf32>
    %66 = arith.mulf %65, %43 : vector<8x128xf32>
    %67 = arith.mulf %66, %43 : vector<8x128xf32>
    %68 = arith.subf %63, %67 : vector<8x128xf32>
    %69 = arith.mulf %60, %68 : vector<8x128xf32>
    %70 = arith.mulf %69, %30 : vector<8x128xf32>
    %cst_20 = arith.constant 2.514120e+00 : f32
    %71 = vector.broadcast %cst_20 : f32 to vector<8x128xf32>
    %72 = arith.mulf %71, %43 : vector<8x128xf32>
    %73 = math.exp %72 : vector<8x128xf32>
    %74 = arith.mulf %73, %30 : vector<8x128xf32>
    %75 = arith.mulf %34, %34 : vector<8x128xf32>
    %cst_21 = arith.constant 5.000000e-01 : f32
    %76 = vector.broadcast %cst_21 : f32 to vector<8x128xf32>
    %77 = arith.mulf %76, %33 : vector<8x128xf32>
    %cst_22 = arith.constant 2.514120e+00 : f32
    %78 = vector.broadcast %cst_22 : f32 to vector<8x128xf32>
    %79 = arith.mulf %78, %43 : vector<8x128xf32>
    %80 = arith.mulf %79, %43 : vector<8x128xf32>
    %81 = tpu.iota {dimensions = array<i32: 0>} : vector<8x1xi32>
    %cst_23 = arith.constant 0.000000e+00 : f32
    %82 = vector.broadcast %cst_23 : f32 to vector<8x128xf32>
    %c0_i32 = arith.constant 0 : i32
    %83 = arith.index_cast %c0_i32 : i32 to index
    %c0_24 = arith.constant 0 : index
    %84 = vector.load %arg2[%83, %c0_24] : memref<32x128xf32, #tpu.memory_space<vmem>>, vector<1x128xf32>
    %c8_i32 = arith.constant 8 : i32
    %85 = arith.addi %c8_i32, %c0_i32 : i32
    %86 = arith.index_cast %85 : i32 to index
    %c0_25 = arith.constant 0 : index
    %87 = vector.load %arg2[%86, %c0_25] : memref<32x128xf32, #tpu.memory_space<vmem>>, vector<1x128xf32>
    %c16_i32 = arith.constant 16 : i32
    %88 = arith.addi %c16_i32, %c0_i32 : i32
    %89 = arith.index_cast %88 : i32 to index
    %c0_26 = arith.constant 0 : index
    %90 = vector.load %arg2[%89, %c0_26] : memref<32x128xf32, #tpu.memory_space<vmem>>, vector<1x128xf32>
    %c24_i32 = arith.constant 24 : i32
    %91 = arith.addi %c24_i32, %c0_i32 : i32
    %92 = arith.index_cast %91 : i32 to index
    %c0_27 = arith.constant 0 : index
    %93 = vector.load %arg2[%92, %c0_27] : memref<32x128xf32, #tpu.memory_space<vmem>>, vector<1x128xf32>
    %94 = arith.subf %84, %2 : vector<1x128xf32>
    %95 = arith.subf %87, %3 : vector<1x128xf32>
    %96 = arith.subf %90, %4 : vector<1x128xf32>
    %97 = arith.mulf %94, %94 : vector<1x128xf32>
    %98 = arith.mulf %95, %95 : vector<1x128xf32>
    %99 = arith.addf %97, %98 : vector<1x128xf32>
    %100 = arith.mulf %96, %96 : vector<1x128xf32>
    %101 = arith.addf %99, %100 : vector<1x128xf32>
    %cst_28 = arith.constant 5.000000e-01 : f32
    %102 = vector.broadcast %cst_28 : f32 to vector<1x128xf32>
    %103 = arith.cmpf ogt, %93, %102 : vector<1x128xf32>
    %cst_29 = arith.constant 14.2217989 : f32
    %104 = vector.broadcast %cst_29 : f32 to vector<1x128xf32>
    %105 = arith.cmpf olt, %101, %104 : vector<1x128xf32>
    %106 = arith.andi %103, %105 : vector<1x128xi1>
    %cst_30 = arith.constant 3.55544972 : f32
    %107 = vector.broadcast %cst_30 : f32 to vector<1x128xf32>
    %108 = arith.select %106, %101, %107 : vector<1x128xi1>, vector<1x128xf32>
    %109 = math.rsqrt %108 : vector<1x128xf32>
    %110 = arith.mulf %108, %109 : vector<1x128xf32>
    %cst_31 = arith.constant 3.771180e+00 : f32
    %111 = vector.broadcast %cst_31 : f32 to vector<1x128xf32>
    %112 = arith.subf %110, %111 : vector<1x128xf32>
    %cst_32 = arith.constant -1.000000e-03 : f32
    %113 = vector.broadcast %cst_32 : f32 to vector<1x128xf32>
    %114 = arith.minimumf %112, %113 : vector<1x128xf32>
    %cst_33 = arith.constant 2.514120e+00 : f32
    %115 = vector.broadcast %cst_33 : f32 to vector<1x128xf32>
    %116 = arith.divf %115, %114 : vector<1x128xf32>
    %117 = math.exp %116 : vector<1x128xf32>
    %118 = arith.extui %106 : vector<1x128xi1> to vector<1x128xi32>
    %119 = arith.sitofp %118 : vector<1x128xi32> to vector<1x128xf32>
    %120 = arith.mulf %117, %119 : vector<1x128xf32>
    %121 = vector.broadcast %84 : vector<1x128xf32> to vector<8x128xf32>
    %122 = arith.subf %121, %5 : vector<8x128xf32>
    %123 = vector.broadcast %87 : vector<1x128xf32> to vector<8x128xf32>
    %124 = arith.subf %123, %6 : vector<8x128xf32>
    %125 = vector.broadcast %90 : vector<1x128xf32> to vector<8x128xf32>
    %126 = arith.subf %125, %7 : vector<8x128xf32>
    %127 = arith.mulf %122, %122 : vector<8x128xf32>
    %128 = arith.mulf %124, %124 : vector<8x128xf32>
    %129 = arith.addf %127, %128 : vector<8x128xf32>
    %130 = arith.mulf %126, %126 : vector<8x128xf32>
    %131 = arith.addf %129, %130 : vector<8x128xf32>
    %132 = arith.mulf %110, %110 : vector<1x128xf32>
    %133 = vector.broadcast %132 : vector<1x128xf32> to vector<8x128xf32>
    %134 = arith.addf %75, %133 : vector<8x128xf32>
    %135 = arith.subf %134, %131 : vector<8x128xf32>
    %136 = arith.mulf %135, %77 : vector<8x128xf32>
    %137 = vector.broadcast %109 : vector<1x128xf32> to vector<8x128xf32>
    %138 = arith.mulf %136, %137 : vector<8x128xf32>
    %cst_34 = arith.constant -0.333333343 : f32
    %139 = vector.broadcast %cst_34 : f32 to vector<8x128xf32>
    %140 = arith.subf %138, %139 : vector<8x128xf32>
    %141 = vector.broadcast %c0_i32 : i32 to vector<8x1xi32>
    %142 = arith.cmpi ne, %81, %141 : vector<8x1xi32>
    %143 = arith.extui %142 : vector<8x1xi1> to vector<8x1xi32>
    %144 = arith.sitofp %143 : vector<8x1xi32> to vector<8x1xf32>
    %cst_35 = arith.constant 4.553220e+01 : f32
    %145 = vector.broadcast %cst_35 : f32 to vector<8x128xf32>
    %146 = arith.mulf %145, %140 : vector<8x128xf32>
    %147 = vector.broadcast %120 : vector<1x128xf32> to vector<8x128xf32>
    %148 = arith.mulf %74, %147 : vector<8x128xf32>
    %149 = arith.mulf %146, %148 : vector<8x128xf32>
    %150 = vector.broadcast %144 : vector<8x1xf32> to vector<8x128xf32>
    %151 = arith.mulf %149, %150 : vector<8x128xf32>
    %152 = arith.mulf %151, %140 : vector<8x128xf32>
    %153 = arith.addf %82, %152 : vector<8x128xf32>
    %154 = arith.mulf %138, %33 : vector<8x128xf32>
    %155 = vector.broadcast %109 : vector<1x128xf32> to vector<8x128xf32>
    %156 = arith.subf %155, %154 : vector<8x128xf32>
    %cst_36 = arith.constant 2.000000e+00 : f32
    %157 = vector.broadcast %cst_36 : f32 to vector<8x128xf32>
    %158 = arith.mulf %157, %156 : vector<8x128xf32>
    %159 = arith.mulf %80, %140 : vector<8x128xf32>
    %160 = arith.subf %158, %159 : vector<8x128xf32>
    %161 = arith.mulf %151, %160 : vector<8x128xf32>
    %162 = arith.addf %82, %161 : vector<8x128xf32>
    %cst_37 = arith.constant 2.000000e+00 : f32
    %163 = vector.broadcast %cst_37 : f32 to vector<8x128xf32>
    %164 = arith.mulf %163, %151 : vector<8x128xf32>
    %165 = arith.mulf %164, %33 : vector<8x128xf32>
    %166 = vector.broadcast %109 : vector<1x128xf32> to vector<8x128xf32>
    %167 = arith.mulf %165, %166 : vector<8x128xf32>
    %168 = arith.mulf %167, %122 : vector<8x128xf32>
    %169 = arith.addf %82, %168 : vector<8x128xf32>
    %170 = arith.mulf %167, %124 : vector<8x128xf32>
    %171 = arith.addf %82, %170 : vector<8x128xf32>
    %172 = arith.mulf %167, %126 : vector<8x128xf32>
    %173 = arith.addf %82, %172 : vector<8x128xf32>
    %c1_i32 = arith.constant 1 : i32
    %174 = arith.index_cast %c1_i32 : i32 to index
    %c0_38 = arith.constant 0 : index
    %175 = vector.load %arg2[%174, %c0_38] : memref<32x128xf32, #tpu.memory_space<vmem>>, vector<1x128xf32>
    %c8_i32_39 = arith.constant 8 : i32
    %176 = arith.addi %c8_i32_39, %c1_i32 : i32
    %177 = arith.index_cast %176 : i32 to index
    %c0_40 = arith.constant 0 : index
    %178 = vector.load %arg2[%177, %c0_40] : memref<32x128xf32, #tpu.memory_space<vmem>>, vector<1x128xf32>
    %c16_i32_41 = arith.constant 16 : i32
    %179 = arith.addi %c16_i32_41, %c1_i32 : i32
    %180 = arith.index_cast %179 : i32 to index
    %c0_42 = arith.constant 0 : index
    %181 = vector.load %arg2[%180, %c0_42] : memref<32x128xf32, #tpu.memory_space<vmem>>, vector<1x128xf32>
    %c24_i32_43 = arith.constant 24 : i32
    %182 = arith.addi %c24_i32_43, %c1_i32 : i32
    %183 = arith.index_cast %182 : i32 to index
    %c0_44 = arith.constant 0 : index
    %184 = vector.load %arg2[%183, %c0_44] : memref<32x128xf32, #tpu.memory_space<vmem>>, vector<1x128xf32>
    %185 = arith.subf %175, %2 : vector<1x128xf32>
    %186 = arith.subf %178, %3 : vector<1x128xf32>
    %187 = arith.subf %181, %4 : vector<1x128xf32>
    %188 = arith.mulf %185, %185 : vector<1x128xf32>
    %189 = arith.mulf %186, %186 : vector<1x128xf32>
    %190 = arith.addf %188, %189 : vector<1x128xf32>
    %191 = arith.mulf %187, %187 : vector<1x128xf32>
    %192 = arith.addf %190, %191 : vector<1x128xf32>
    %cst_45 = arith.constant 5.000000e-01 : f32
    %193 = vector.broadcast %cst_45 : f32 to vector<1x128xf32>
    %194 = arith.cmpf ogt, %184, %193 : vector<1x128xf32>
    %cst_46 = arith.constant 14.2217989 : f32
    %195 = vector.broadcast %cst_46 : f32 to vector<1x128xf32>
    %196 = arith.cmpf olt, %192, %195 : vector<1x128xf32>
    %197 = arith.andi %194, %196 : vector<1x128xi1>
    %cst_47 = arith.constant 3.55544972 : f32
    %198 = vector.broadcast %cst_47 : f32 to vector<1x128xf32>
    %199 = arith.select %197, %192, %198 : vector<1x128xi1>, vector<1x128xf32>
    %200 = math.rsqrt %199 : vector<1x128xf32>
    %201 = arith.mulf %199, %200 : vector<1x128xf32>
    %cst_48 = arith.constant 3.771180e+00 : f32
    %202 = vector.broadcast %cst_48 : f32 to vector<1x128xf32>
    %203 = arith.subf %201, %202 : vector<1x128xf32>
    %cst_49 = arith.constant -1.000000e-03 : f32
    %204 = vector.broadcast %cst_49 : f32 to vector<1x128xf32>
    %205 = arith.minimumf %203, %204 : vector<1x128xf32>
    %cst_50 = arith.constant 2.514120e+00 : f32
    %206 = vector.broadcast %cst_50 : f32 to vector<1x128xf32>
    %207 = arith.divf %206, %205 : vector<1x128xf32>
    %208 = math.exp %207 : vector<1x128xf32>
    %209 = arith.extui %197 : vector<1x128xi1> to vector<1x128xi32>
    %210 = arith.sitofp %209 : vector<1x128xi32> to vector<1x128xf32>
    %211 = arith.mulf %208, %210 : vector<1x128xf32>
    %212 = vector.broadcast %175 : vector<1x128xf32> to vector<8x128xf32>
    %213 = arith.subf %212, %5 : vector<8x128xf32>
    %214 = vector.broadcast %178 : vector<1x128xf32> to vector<8x128xf32>
    %215 = arith.subf %214, %6 : vector<8x128xf32>
    %216 = vector.broadcast %181 : vector<1x128xf32> to vector<8x128xf32>
    %217 = arith.subf %216, %7 : vector<8x128xf32>
    %218 = arith.mulf %213, %213 : vector<8x128xf32>
    %219 = arith.mulf %215, %215 : vector<8x128xf32>
    %220 = arith.addf %218, %219 : vector<8x128xf32>
    %221 = arith.mulf %217, %217 : vector<8x128xf32>
    %222 = arith.addf %220, %221 : vector<8x128xf32>
    %223 = arith.mulf %201, %201 : vector<1x128xf32>
    %224 = vector.broadcast %223 : vector<1x128xf32> to vector<8x128xf32>
    %225 = arith.addf %75, %224 : vector<8x128xf32>
    %226 = arith.subf %225, %222 : vector<8x128xf32>
    %227 = arith.mulf %226, %77 : vector<8x128xf32>
    %228 = vector.broadcast %200 : vector<1x128xf32> to vector<8x128xf32>
    %229 = arith.mulf %227, %228 : vector<8x128xf32>
    %cst_51 = arith.constant -0.333333343 : f32
    %230 = vector.broadcast %cst_51 : f32 to vector<8x128xf32>
    %231 = arith.subf %229, %230 : vector<8x128xf32>
    %232 = vector.broadcast %c1_i32 : i32 to vector<8x1xi32>
    %233 = arith.cmpi ne, %81, %232 : vector<8x1xi32>
    %234 = arith.extui %233 : vector<8x1xi1> to vector<8x1xi32>
    %235 = arith.sitofp %234 : vector<8x1xi32> to vector<8x1xf32>
    %cst_52 = arith.constant 4.553220e+01 : f32
    %236 = vector.broadcast %cst_52 : f32 to vector<8x128xf32>
    %237 = arith.mulf %236, %231 : vector<8x128xf32>
    %238 = vector.broadcast %211 : vector<1x128xf32> to vector<8x128xf32>
    %239 = arith.mulf %74, %238 : vector<8x128xf32>
    %240 = arith.mulf %237, %239 : vector<8x128xf32>
    %241 = vector.broadcast %235 : vector<8x1xf32> to vector<8x128xf32>
    %242 = arith.mulf %240, %241 : vector<8x128xf32>
    %243 = arith.mulf %242, %231 : vector<8x128xf32>
    %244 = arith.addf %153, %243 : vector<8x128xf32>
    %245 = arith.mulf %229, %33 : vector<8x128xf32>
    %246 = vector.broadcast %200 : vector<1x128xf32> to vector<8x128xf32>
    %247 = arith.subf %246, %245 : vector<8x128xf32>
    %cst_53 = arith.constant 2.000000e+00 : f32
    %248 = vector.broadcast %cst_53 : f32 to vector<8x128xf32>
    %249 = arith.mulf %248, %247 : vector<8x128xf32>
    %250 = arith.mulf %80, %231 : vector<8x128xf32>
    %251 = arith.subf %249, %250 : vector<8x128xf32>
    %252 = arith.mulf %242, %251 : vector<8x128xf32>
    %253 = arith.addf %162, %252 : vector<8x128xf32>
    %cst_54 = arith.constant 2.000000e+00 : f32
    %254 = vector.broadcast %cst_54 : f32 to vector<8x128xf32>
    %255 = arith.mulf %254, %242 : vector<8x128xf32>
    %256 = arith.mulf %255, %33 : vector<8x128xf32>
    %257 = vector.broadcast %200 : vector<1x128xf32> to vector<8x128xf32>
    %258 = arith.mulf %256, %257 : vector<8x128xf32>
    %259 = arith.mulf %258, %213 : vector<8x128xf32>
    %260 = arith.addf %169, %259 : vector<8x128xf32>
    %261 = arith.mulf %258, %215 : vector<8x128xf32>
    %262 = arith.addf %171, %261 : vector<8x128xf32>
    %263 = arith.mulf %258, %217 : vector<8x128xf32>
    %264 = arith.addf %173, %263 : vector<8x128xf32>
    %c2_i32 = arith.constant 2 : i32
    %265 = arith.index_cast %c2_i32 : i32 to index
    %c0_55 = arith.constant 0 : index
    %266 = vector.load %arg2[%265, %c0_55] : memref<32x128xf32, #tpu.memory_space<vmem>>, vector<1x128xf32>
    %c8_i32_56 = arith.constant 8 : i32
    %267 = arith.addi %c8_i32_56, %c2_i32 : i32
    %268 = arith.index_cast %267 : i32 to index
    %c0_57 = arith.constant 0 : index
    %269 = vector.load %arg2[%268, %c0_57] : memref<32x128xf32, #tpu.memory_space<vmem>>, vector<1x128xf32>
    %c16_i32_58 = arith.constant 16 : i32
    %270 = arith.addi %c16_i32_58, %c2_i32 : i32
    %271 = arith.index_cast %270 : i32 to index
    %c0_59 = arith.constant 0 : index
    %272 = vector.load %arg2[%271, %c0_59] : memref<32x128xf32, #tpu.memory_space<vmem>>, vector<1x128xf32>
    %c24_i32_60 = arith.constant 24 : i32
    %273 = arith.addi %c24_i32_60, %c2_i32 : i32
    %274 = arith.index_cast %273 : i32 to index
    %c0_61 = arith.constant 0 : index
    %275 = vector.load %arg2[%274, %c0_61] : memref<32x128xf32, #tpu.memory_space<vmem>>, vector<1x128xf32>
    %276 = arith.subf %266, %2 : vector<1x128xf32>
    %277 = arith.subf %269, %3 : vector<1x128xf32>
    %278 = arith.subf %272, %4 : vector<1x128xf32>
    %279 = arith.mulf %276, %276 : vector<1x128xf32>
    %280 = arith.mulf %277, %277 : vector<1x128xf32>
    %281 = arith.addf %279, %280 : vector<1x128xf32>
    %282 = arith.mulf %278, %278 : vector<1x128xf32>
    %283 = arith.addf %281, %282 : vector<1x128xf32>
    %cst_62 = arith.constant 5.000000e-01 : f32
    %284 = vector.broadcast %cst_62 : f32 to vector<1x128xf32>
    %285 = arith.cmpf ogt, %275, %284 : vector<1x128xf32>
    %cst_63 = arith.constant 14.2217989 : f32
    %286 = vector.broadcast %cst_63 : f32 to vector<1x128xf32>
    %287 = arith.cmpf olt, %283, %286 : vector<1x128xf32>
    %288 = arith.andi %285, %287 : vector<1x128xi1>
    %cst_64 = arith.constant 3.55544972 : f32
    %289 = vector.broadcast %cst_64 : f32 to vector<1x128xf32>
    %290 = arith.select %288, %283, %289 : vector<1x128xi1>, vector<1x128xf32>
    %291 = math.rsqrt %290 : vector<1x128xf32>
    %292 = arith.mulf %290, %291 : vector<1x128xf32>
    %cst_65 = arith.constant 3.771180e+00 : f32
    %293 = vector.broadcast %cst_65 : f32 to vector<1x128xf32>
    %294 = arith.subf %292, %293 : vector<1x128xf32>
    %cst_66 = arith.constant -1.000000e-03 : f32
    %295 = vector.broadcast %cst_66 : f32 to vector<1x128xf32>
    %296 = arith.minimumf %294, %295 : vector<1x128xf32>
    %cst_67 = arith.constant 2.514120e+00 : f32
    %297 = vector.broadcast %cst_67 : f32 to vector<1x128xf32>
    %298 = arith.divf %297, %296 : vector<1x128xf32>
    %299 = math.exp %298 : vector<1x128xf32>
    %300 = arith.extui %288 : vector<1x128xi1> to vector<1x128xi32>
    %301 = arith.sitofp %300 : vector<1x128xi32> to vector<1x128xf32>
    %302 = arith.mulf %299, %301 : vector<1x128xf32>
    %303 = vector.broadcast %266 : vector<1x128xf32> to vector<8x128xf32>
    %304 = arith.subf %303, %5 : vector<8x128xf32>
    %305 = vector.broadcast %269 : vector<1x128xf32> to vector<8x128xf32>
    %306 = arith.subf %305, %6 : vector<8x128xf32>
    %307 = vector.broadcast %272 : vector<1x128xf32> to vector<8x128xf32>
    %308 = arith.subf %307, %7 : vector<8x128xf32>
    %309 = arith.mulf %304, %304 : vector<8x128xf32>
    %310 = arith.mulf %306, %306 : vector<8x128xf32>
    %311 = arith.addf %309, %310 : vector<8x128xf32>
    %312 = arith.mulf %308, %308 : vector<8x128xf32>
    %313 = arith.addf %311, %312 : vector<8x128xf32>
    %314 = arith.mulf %292, %292 : vector<1x128xf32>
    %315 = vector.broadcast %314 : vector<1x128xf32> to vector<8x128xf32>
    %316 = arith.addf %75, %315 : vector<8x128xf32>
    %317 = arith.subf %316, %313 : vector<8x128xf32>
    %318 = arith.mulf %317, %77 : vector<8x128xf32>
    %319 = vector.broadcast %291 : vector<1x128xf32> to vector<8x128xf32>
    %320 = arith.mulf %318, %319 : vector<8x128xf32>
    %cst_68 = arith.constant -0.333333343 : f32
    %321 = vector.broadcast %cst_68 : f32 to vector<8x128xf32>
    %322 = arith.subf %320, %321 : vector<8x128xf32>
    %323 = vector.broadcast %c2_i32 : i32 to vector<8x1xi32>
    %324 = arith.cmpi ne, %81, %323 : vector<8x1xi32>
    %325 = arith.extui %324 : vector<8x1xi1> to vector<8x1xi32>
    %326 = arith.sitofp %325 : vector<8x1xi32> to vector<8x1xf32>
    %cst_69 = arith.constant 4.553220e+01 : f32
    %327 = vector.broadcast %cst_69 : f32 to vector<8x128xf32>
    %328 = arith.mulf %327, %322 : vector<8x128xf32>
    %329 = vector.broadcast %302 : vector<1x128xf32> to vector<8x128xf32>
    %330 = arith.mulf %74, %329 : vector<8x128xf32>
    %331 = arith.mulf %328, %330 : vector<8x128xf32>
    %332 = vector.broadcast %326 : vector<8x1xf32> to vector<8x128xf32>
    %333 = arith.mulf %331, %332 : vector<8x128xf32>
    %334 = arith.mulf %333, %322 : vector<8x128xf32>
    %335 = arith.addf %244, %334 : vector<8x128xf32>
    %336 = arith.mulf %320, %33 : vector<8x128xf32>
    %337 = vector.broadcast %291 : vector<1x128xf32> to vector<8x128xf32>
    %338 = arith.subf %337, %336 : vector<8x128xf32>
    %cst_70 = arith.constant 2.000000e+00 : f32
    %339 = vector.broadcast %cst_70 : f32 to vector<8x128xf32>
    %340 = arith.mulf %339, %338 : vector<8x128xf32>
    %341 = arith.mulf %80, %322 : vector<8x128xf32>
    %342 = arith.subf %340, %341 : vector<8x128xf32>
    %343 = arith.mulf %333, %342 : vector<8x128xf32>
    %344 = arith.addf %253, %343 : vector<8x128xf32>
    %cst_71 = arith.constant 2.000000e+00 : f32
    %345 = vector.broadcast %cst_71 : f32 to vector<8x128xf32>
    %346 = arith.mulf %345, %333 : vector<8x128xf32>
    %347 = arith.mulf %346, %33 : vector<8x128xf32>
    %348 = vector.broadcast %291 : vector<1x128xf32> to vector<8x128xf32>
    %349 = arith.mulf %347, %348 : vector<8x128xf32>
    %350 = arith.mulf %349, %304 : vector<8x128xf32>
    %351 = arith.addf %260, %350 : vector<8x128xf32>
    %352 = arith.mulf %349, %306 : vector<8x128xf32>
    %353 = arith.addf %262, %352 : vector<8x128xf32>
    %354 = arith.mulf %349, %308 : vector<8x128xf32>
    %355 = arith.addf %264, %354 : vector<8x128xf32>
    %c3_i32 = arith.constant 3 : i32
    %356 = arith.index_cast %c3_i32 : i32 to index
    %c0_72 = arith.constant 0 : index
    %357 = vector.load %arg2[%356, %c0_72] : memref<32x128xf32, #tpu.memory_space<vmem>>, vector<1x128xf32>
    %c8_i32_73 = arith.constant 8 : i32
    %358 = arith.addi %c8_i32_73, %c3_i32 : i32
    %359 = arith.index_cast %358 : i32 to index
    %c0_74 = arith.constant 0 : index
    %360 = vector.load %arg2[%359, %c0_74] : memref<32x128xf32, #tpu.memory_space<vmem>>, vector<1x128xf32>
    %c16_i32_75 = arith.constant 16 : i32
    %361 = arith.addi %c16_i32_75, %c3_i32 : i32
    %362 = arith.index_cast %361 : i32 to index
    %c0_76 = arith.constant 0 : index
    %363 = vector.load %arg2[%362, %c0_76] : memref<32x128xf32, #tpu.memory_space<vmem>>, vector<1x128xf32>
    %c24_i32_77 = arith.constant 24 : i32
    %364 = arith.addi %c24_i32_77, %c3_i32 : i32
    %365 = arith.index_cast %364 : i32 to index
    %c0_78 = arith.constant 0 : index
    %366 = vector.load %arg2[%365, %c0_78] : memref<32x128xf32, #tpu.memory_space<vmem>>, vector<1x128xf32>
    %367 = arith.subf %357, %2 : vector<1x128xf32>
    %368 = arith.subf %360, %3 : vector<1x128xf32>
    %369 = arith.subf %363, %4 : vector<1x128xf32>
    %370 = arith.mulf %367, %367 : vector<1x128xf32>
    %371 = arith.mulf %368, %368 : vector<1x128xf32>
    %372 = arith.addf %370, %371 : vector<1x128xf32>
    %373 = arith.mulf %369, %369 : vector<1x128xf32>
    %374 = arith.addf %372, %373 : vector<1x128xf32>
    %cst_79 = arith.constant 5.000000e-01 : f32
    %375 = vector.broadcast %cst_79 : f32 to vector<1x128xf32>
    %376 = arith.cmpf ogt, %366, %375 : vector<1x128xf32>
    %cst_80 = arith.constant 14.2217989 : f32
    %377 = vector.broadcast %cst_80 : f32 to vector<1x128xf32>
    %378 = arith.cmpf olt, %374, %377 : vector<1x128xf32>
    %379 = arith.andi %376, %378 : vector<1x128xi1>
    %cst_81 = arith.constant 3.55544972 : f32
    %380 = vector.broadcast %cst_81 : f32 to vector<1x128xf32>
    %381 = arith.select %379, %374, %380 : vector<1x128xi1>, vector<1x128xf32>
    %382 = math.rsqrt %381 : vector<1x128xf32>
    %383 = arith.mulf %381, %382 : vector<1x128xf32>
    %cst_82 = arith.constant 3.771180e+00 : f32
    %384 = vector.broadcast %cst_82 : f32 to vector<1x128xf32>
    %385 = arith.subf %383, %384 : vector<1x128xf32>
    %cst_83 = arith.constant -1.000000e-03 : f32
    %386 = vector.broadcast %cst_83 : f32 to vector<1x128xf32>
    %387 = arith.minimumf %385, %386 : vector<1x128xf32>
    %cst_84 = arith.constant 2.514120e+00 : f32
    %388 = vector.broadcast %cst_84 : f32 to vector<1x128xf32>
    %389 = arith.divf %388, %387 : vector<1x128xf32>
    %390 = math.exp %389 : vector<1x128xf32>
    %391 = arith.extui %379 : vector<1x128xi1> to vector<1x128xi32>
    %392 = arith.sitofp %391 : vector<1x128xi32> to vector<1x128xf32>
    %393 = arith.mulf %390, %392 : vector<1x128xf32>
    %394 = vector.broadcast %357 : vector<1x128xf32> to vector<8x128xf32>
    %395 = arith.subf %394, %5 : vector<8x128xf32>
    %396 = vector.broadcast %360 : vector<1x128xf32> to vector<8x128xf32>
    %397 = arith.subf %396, %6 : vector<8x128xf32>
    %398 = vector.broadcast %363 : vector<1x128xf32> to vector<8x128xf32>
    %399 = arith.subf %398, %7 : vector<8x128xf32>
    %400 = arith.mulf %395, %395 : vector<8x128xf32>
    %401 = arith.mulf %397, %397 : vector<8x128xf32>
    %402 = arith.addf %400, %401 : vector<8x128xf32>
    %403 = arith.mulf %399, %399 : vector<8x128xf32>
    %404 = arith.addf %402, %403 : vector<8x128xf32>
    %405 = arith.mulf %383, %383 : vector<1x128xf32>
    %406 = vector.broadcast %405 : vector<1x128xf32> to vector<8x128xf32>
    %407 = arith.addf %75, %406 : vector<8x128xf32>
    %408 = arith.subf %407, %404 : vector<8x128xf32>
    %409 = arith.mulf %408, %77 : vector<8x128xf32>
    %410 = vector.broadcast %382 : vector<1x128xf32> to vector<8x128xf32>
    %411 = arith.mulf %409, %410 : vector<8x128xf32>
    %cst_85 = arith.constant -0.333333343 : f32
    %412 = vector.broadcast %cst_85 : f32 to vector<8x128xf32>
    %413 = arith.subf %411, %412 : vector<8x128xf32>
    %414 = vector.broadcast %c3_i32 : i32 to vector<8x1xi32>
    %415 = arith.cmpi ne, %81, %414 : vector<8x1xi32>
    %416 = arith.extui %415 : vector<8x1xi1> to vector<8x1xi32>
    %417 = arith.sitofp %416 : vector<8x1xi32> to vector<8x1xf32>
    %cst_86 = arith.constant 4.553220e+01 : f32
    %418 = vector.broadcast %cst_86 : f32 to vector<8x128xf32>
    %419 = arith.mulf %418, %413 : vector<8x128xf32>
    %420 = vector.broadcast %393 : vector<1x128xf32> to vector<8x128xf32>
    %421 = arith.mulf %74, %420 : vector<8x128xf32>
    %422 = arith.mulf %419, %421 : vector<8x128xf32>
    %423 = vector.broadcast %417 : vector<8x1xf32> to vector<8x128xf32>
    %424 = arith.mulf %422, %423 : vector<8x128xf32>
    %425 = arith.mulf %424, %413 : vector<8x128xf32>
    %426 = arith.addf %335, %425 : vector<8x128xf32>
    %427 = arith.mulf %411, %33 : vector<8x128xf32>
    %428 = vector.broadcast %382 : vector<1x128xf32> to vector<8x128xf32>
    %429 = arith.subf %428, %427 : vector<8x128xf32>
    %cst_87 = arith.constant 2.000000e+00 : f32
    %430 = vector.broadcast %cst_87 : f32 to vector<8x128xf32>
    %431 = arith.mulf %430, %429 : vector<8x128xf32>
    %432 = arith.mulf %80, %413 : vector<8x128xf32>
    %433 = arith.subf %431, %432 : vector<8x128xf32>
    %434 = arith.mulf %424, %433 : vector<8x128xf32>
    %435 = arith.addf %344, %434 : vector<8x128xf32>
    %cst_88 = arith.constant 2.000000e+00 : f32
    %436 = vector.broadcast %cst_88 : f32 to vector<8x128xf32>
    %437 = arith.mulf %436, %424 : vector<8x128xf32>
    %438 = arith.mulf %437, %33 : vector<8x128xf32>
    %439 = vector.broadcast %382 : vector<1x128xf32> to vector<8x128xf32>
    %440 = arith.mulf %438, %439 : vector<8x128xf32>
    %441 = arith.mulf %440, %395 : vector<8x128xf32>
    %442 = arith.addf %351, %441 : vector<8x128xf32>
    %443 = arith.mulf %440, %397 : vector<8x128xf32>
    %444 = arith.addf %353, %443 : vector<8x128xf32>
    %445 = arith.mulf %440, %399 : vector<8x128xf32>
    %446 = arith.addf %355, %445 : vector<8x128xf32>
    %c4_i32 = arith.constant 4 : i32
    %447 = arith.index_cast %c4_i32 : i32 to index
    %c0_89 = arith.constant 0 : index
    %448 = vector.load %arg2[%447, %c0_89] : memref<32x128xf32, #tpu.memory_space<vmem>>, vector<1x128xf32>
    %c8_i32_90 = arith.constant 8 : i32
    %449 = arith.addi %c8_i32_90, %c4_i32 : i32
    %450 = arith.index_cast %449 : i32 to index
    %c0_91 = arith.constant 0 : index
    %451 = vector.load %arg2[%450, %c0_91] : memref<32x128xf32, #tpu.memory_space<vmem>>, vector<1x128xf32>
    %c16_i32_92 = arith.constant 16 : i32
    %452 = arith.addi %c16_i32_92, %c4_i32 : i32
    %453 = arith.index_cast %452 : i32 to index
    %c0_93 = arith.constant 0 : index
    %454 = vector.load %arg2[%453, %c0_93] : memref<32x128xf32, #tpu.memory_space<vmem>>, vector<1x128xf32>
    %c24_i32_94 = arith.constant 24 : i32
    %455 = arith.addi %c24_i32_94, %c4_i32 : i32
    %456 = arith.index_cast %455 : i32 to index
    %c0_95 = arith.constant 0 : index
    %457 = vector.load %arg2[%456, %c0_95] : memref<32x128xf32, #tpu.memory_space<vmem>>, vector<1x128xf32>
    %458 = arith.subf %448, %2 : vector<1x128xf32>
    %459 = arith.subf %451, %3 : vector<1x128xf32>
    %460 = arith.subf %454, %4 : vector<1x128xf32>
    %461 = arith.mulf %458, %458 : vector<1x128xf32>
    %462 = arith.mulf %459, %459 : vector<1x128xf32>
    %463 = arith.addf %461, %462 : vector<1x128xf32>
    %464 = arith.mulf %460, %460 : vector<1x128xf32>
    %465 = arith.addf %463, %464 : vector<1x128xf32>
    %cst_96 = arith.constant 5.000000e-01 : f32
    %466 = vector.broadcast %cst_96 : f32 to vector<1x128xf32>
    %467 = arith.cmpf ogt, %457, %466 : vector<1x128xf32>
    %cst_97 = arith.constant 14.2217989 : f32
    %468 = vector.broadcast %cst_97 : f32 to vector<1x128xf32>
    %469 = arith.cmpf olt, %465, %468 : vector<1x128xf32>
    %470 = arith.andi %467, %469 : vector<1x128xi1>
    %cst_98 = arith.constant 3.55544972 : f32
    %471 = vector.broadcast %cst_98 : f32 to vector<1x128xf32>
    %472 = arith.select %470, %465, %471 : vector<1x128xi1>, vector<1x128xf32>
    %473 = math.rsqrt %472 : vector<1x128xf32>
    %474 = arith.mulf %472, %473 : vector<1x128xf32>
    %cst_99 = arith.constant 3.771180e+00 : f32
    %475 = vector.broadcast %cst_99 : f32 to vector<1x128xf32>
    %476 = arith.subf %474, %475 : vector<1x128xf32>
    %cst_100 = arith.constant -1.000000e-03 : f32
    %477 = vector.broadcast %cst_100 : f32 to vector<1x128xf32>
    %478 = arith.minimumf %476, %477 : vector<1x128xf32>
    %cst_101 = arith.constant 2.514120e+00 : f32
    %479 = vector.broadcast %cst_101 : f32 to vector<1x128xf32>
    %480 = arith.divf %479, %478 : vector<1x128xf32>
    %481 = math.exp %480 : vector<1x128xf32>
    %482 = arith.extui %470 : vector<1x128xi1> to vector<1x128xi32>
    %483 = arith.sitofp %482 : vector<1x128xi32> to vector<1x128xf32>
    %484 = arith.mulf %481, %483 : vector<1x128xf32>
    %485 = vector.broadcast %448 : vector<1x128xf32> to vector<8x128xf32>
    %486 = arith.subf %485, %5 : vector<8x128xf32>
    %487 = vector.broadcast %451 : vector<1x128xf32> to vector<8x128xf32>
    %488 = arith.subf %487, %6 : vector<8x128xf32>
    %489 = vector.broadcast %454 : vector<1x128xf32> to vector<8x128xf32>
    %490 = arith.subf %489, %7 : vector<8x128xf32>
    %491 = arith.mulf %486, %486 : vector<8x128xf32>
    %492 = arith.mulf %488, %488 : vector<8x128xf32>
    %493 = arith.addf %491, %492 : vector<8x128xf32>
    %494 = arith.mulf %490, %490 : vector<8x128xf32>
    %495 = arith.addf %493, %494 : vector<8x128xf32>
    %496 = arith.mulf %474, %474 : vector<1x128xf32>
    %497 = vector.broadcast %496 : vector<1x128xf32> to vector<8x128xf32>
    %498 = arith.addf %75, %497 : vector<8x128xf32>
    %499 = arith.subf %498, %495 : vector<8x128xf32>
    %500 = arith.mulf %499, %77 : vector<8x128xf32>
    %501 = vector.broadcast %473 : vector<1x128xf32> to vector<8x128xf32>
    %502 = arith.mulf %500, %501 : vector<8x128xf32>
    %cst_102 = arith.constant -0.333333343 : f32
    %503 = vector.broadcast %cst_102 : f32 to vector<8x128xf32>
    %504 = arith.subf %502, %503 : vector<8x128xf32>
    %505 = vector.broadcast %c4_i32 : i32 to vector<8x1xi32>
    %506 = arith.cmpi ne, %81, %505 : vector<8x1xi32>
    %507 = arith.extui %506 : vector<8x1xi1> to vector<8x1xi32>
    %508 = arith.sitofp %507 : vector<8x1xi32> to vector<8x1xf32>
    %cst_103 = arith.constant 4.553220e+01 : f32
    %509 = vector.broadcast %cst_103 : f32 to vector<8x128xf32>
    %510 = arith.mulf %509, %504 : vector<8x128xf32>
    %511 = vector.broadcast %484 : vector<1x128xf32> to vector<8x128xf32>
    %512 = arith.mulf %74, %511 : vector<8x128xf32>
    %513 = arith.mulf %510, %512 : vector<8x128xf32>
    %514 = vector.broadcast %508 : vector<8x1xf32> to vector<8x128xf32>
    %515 = arith.mulf %513, %514 : vector<8x128xf32>
    %516 = arith.mulf %515, %504 : vector<8x128xf32>
    %517 = arith.addf %426, %516 : vector<8x128xf32>
    %518 = arith.mulf %502, %33 : vector<8x128xf32>
    %519 = vector.broadcast %473 : vector<1x128xf32> to vector<8x128xf32>
    %520 = arith.subf %519, %518 : vector<8x128xf32>
    %cst_104 = arith.constant 2.000000e+00 : f32
    %521 = vector.broadcast %cst_104 : f32 to vector<8x128xf32>
    %522 = arith.mulf %521, %520 : vector<8x128xf32>
    %523 = arith.mulf %80, %504 : vector<8x128xf32>
    %524 = arith.subf %522, %523 : vector<8x128xf32>
    %525 = arith.mulf %515, %524 : vector<8x128xf32>
    %526 = arith.addf %435, %525 : vector<8x128xf32>
    %cst_105 = arith.constant 2.000000e+00 : f32
    %527 = vector.broadcast %cst_105 : f32 to vector<8x128xf32>
    %528 = arith.mulf %527, %515 : vector<8x128xf32>
    %529 = arith.mulf %528, %33 : vector<8x128xf32>
    %530 = vector.broadcast %473 : vector<1x128xf32> to vector<8x128xf32>
    %531 = arith.mulf %529, %530 : vector<8x128xf32>
    %532 = arith.mulf %531, %486 : vector<8x128xf32>
    %533 = arith.addf %442, %532 : vector<8x128xf32>
    %534 = arith.mulf %531, %488 : vector<8x128xf32>
    %535 = arith.addf %444, %534 : vector<8x128xf32>
    %536 = arith.mulf %531, %490 : vector<8x128xf32>
    %537 = arith.addf %446, %536 : vector<8x128xf32>
    %c5_i32 = arith.constant 5 : i32
    %538 = arith.index_cast %c5_i32 : i32 to index
    %c0_106 = arith.constant 0 : index
    %539 = vector.load %arg2[%538, %c0_106] : memref<32x128xf32, #tpu.memory_space<vmem>>, vector<1x128xf32>
    %c8_i32_107 = arith.constant 8 : i32
    %540 = arith.addi %c8_i32_107, %c5_i32 : i32
    %541 = arith.index_cast %540 : i32 to index
    %c0_108 = arith.constant 0 : index
    %542 = vector.load %arg2[%541, %c0_108] : memref<32x128xf32, #tpu.memory_space<vmem>>, vector<1x128xf32>
    %c16_i32_109 = arith.constant 16 : i32
    %543 = arith.addi %c16_i32_109, %c5_i32 : i32
    %544 = arith.index_cast %543 : i32 to index
    %c0_110 = arith.constant 0 : index
    %545 = vector.load %arg2[%544, %c0_110] : memref<32x128xf32, #tpu.memory_space<vmem>>, vector<1x128xf32>
    %c24_i32_111 = arith.constant 24 : i32
    %546 = arith.addi %c24_i32_111, %c5_i32 : i32
    %547 = arith.index_cast %546 : i32 to index
    %c0_112 = arith.constant 0 : index
    %548 = vector.load %arg2[%547, %c0_112] : memref<32x128xf32, #tpu.memory_space<vmem>>, vector<1x128xf32>
    %549 = arith.subf %539, %2 : vector<1x128xf32>
    %550 = arith.subf %542, %3 : vector<1x128xf32>
    %551 = arith.subf %545, %4 : vector<1x128xf32>
    %552 = arith.mulf %549, %549 : vector<1x128xf32>
    %553 = arith.mulf %550, %550 : vector<1x128xf32>
    %554 = arith.addf %552, %553 : vector<1x128xf32>
    %555 = arith.mulf %551, %551 : vector<1x128xf32>
    %556 = arith.addf %554, %555 : vector<1x128xf32>
    %cst_113 = arith.constant 5.000000e-01 : f32
    %557 = vector.broadcast %cst_113 : f32 to vector<1x128xf32>
    %558 = arith.cmpf ogt, %548, %557 : vector<1x128xf32>
    %cst_114 = arith.constant 14.2217989 : f32
    %559 = vector.broadcast %cst_114 : f32 to vector<1x128xf32>
    %560 = arith.cmpf olt, %556, %559 : vector<1x128xf32>
    %561 = arith.andi %558, %560 : vector<1x128xi1>
    %cst_115 = arith.constant 3.55544972 : f32
    %562 = vector.broadcast %cst_115 : f32 to vector<1x128xf32>
    %563 = arith.select %561, %556, %562 : vector<1x128xi1>, vector<1x128xf32>
    %564 = math.rsqrt %563 : vector<1x128xf32>
    %565 = arith.mulf %563, %564 : vector<1x128xf32>
    %cst_116 = arith.constant 3.771180e+00 : f32
    %566 = vector.broadcast %cst_116 : f32 to vector<1x128xf32>
    %567 = arith.subf %565, %566 : vector<1x128xf32>
    %cst_117 = arith.constant -1.000000e-03 : f32
    %568 = vector.broadcast %cst_117 : f32 to vector<1x128xf32>
    %569 = arith.minimumf %567, %568 : vector<1x128xf32>
    %cst_118 = arith.constant 2.514120e+00 : f32
    %570 = vector.broadcast %cst_118 : f32 to vector<1x128xf32>
    %571 = arith.divf %570, %569 : vector<1x128xf32>
    %572 = math.exp %571 : vector<1x128xf32>
    %573 = arith.extui %561 : vector<1x128xi1> to vector<1x128xi32>
    %574 = arith.sitofp %573 : vector<1x128xi32> to vector<1x128xf32>
    %575 = arith.mulf %572, %574 : vector<1x128xf32>
    %576 = vector.broadcast %539 : vector<1x128xf32> to vector<8x128xf32>
    %577 = arith.subf %576, %5 : vector<8x128xf32>
    %578 = vector.broadcast %542 : vector<1x128xf32> to vector<8x128xf32>
    %579 = arith.subf %578, %6 : vector<8x128xf32>
    %580 = vector.broadcast %545 : vector<1x128xf32> to vector<8x128xf32>
    %581 = arith.subf %580, %7 : vector<8x128xf32>
    %582 = arith.mulf %577, %577 : vector<8x128xf32>
    %583 = arith.mulf %579, %579 : vector<8x128xf32>
    %584 = arith.addf %582, %583 : vector<8x128xf32>
    %585 = arith.mulf %581, %581 : vector<8x128xf32>
    %586 = arith.addf %584, %585 : vector<8x128xf32>
    %587 = arith.mulf %565, %565 : vector<1x128xf32>
    %588 = vector.broadcast %587 : vector<1x128xf32> to vector<8x128xf32>
    %589 = arith.addf %75, %588 : vector<8x128xf32>
    %590 = arith.subf %589, %586 : vector<8x128xf32>
    %591 = arith.mulf %590, %77 : vector<8x128xf32>
    %592 = vector.broadcast %564 : vector<1x128xf32> to vector<8x128xf32>
    %593 = arith.mulf %591, %592 : vector<8x128xf32>
    %cst_119 = arith.constant -0.333333343 : f32
    %594 = vector.broadcast %cst_119 : f32 to vector<8x128xf32>
    %595 = arith.subf %593, %594 : vector<8x128xf32>
    %596 = vector.broadcast %c5_i32 : i32 to vector<8x1xi32>
    %597 = arith.cmpi ne, %81, %596 : vector<8x1xi32>
    %598 = arith.extui %597 : vector<8x1xi1> to vector<8x1xi32>
    %599 = arith.sitofp %598 : vector<8x1xi32> to vector<8x1xf32>
    %cst_120 = arith.constant 4.553220e+01 : f32
    %600 = vector.broadcast %cst_120 : f32 to vector<8x128xf32>
    %601 = arith.mulf %600, %595 : vector<8x128xf32>
    %602 = vector.broadcast %575 : vector<1x128xf32> to vector<8x128xf32>
    %603 = arith.mulf %74, %602 : vector<8x128xf32>
    %604 = arith.mulf %601, %603 : vector<8x128xf32>
    %605 = vector.broadcast %599 : vector<8x1xf32> to vector<8x128xf32>
    %606 = arith.mulf %604, %605 : vector<8x128xf32>
    %607 = arith.mulf %606, %595 : vector<8x128xf32>
    %608 = arith.addf %517, %607 : vector<8x128xf32>
    %609 = arith.mulf %593, %33 : vector<8x128xf32>
    %610 = vector.broadcast %564 : vector<1x128xf32> to vector<8x128xf32>
    %611 = arith.subf %610, %609 : vector<8x128xf32>
    %cst_121 = arith.constant 2.000000e+00 : f32
    %612 = vector.broadcast %cst_121 : f32 to vector<8x128xf32>
    %613 = arith.mulf %612, %611 : vector<8x128xf32>
    %614 = arith.mulf %80, %595 : vector<8x128xf32>
    %615 = arith.subf %613, %614 : vector<8x128xf32>
    %616 = arith.mulf %606, %615 : vector<8x128xf32>
    %617 = arith.addf %526, %616 : vector<8x128xf32>
    %cst_122 = arith.constant 2.000000e+00 : f32
    %618 = vector.broadcast %cst_122 : f32 to vector<8x128xf32>
    %619 = arith.mulf %618, %606 : vector<8x128xf32>
    %620 = arith.mulf %619, %33 : vector<8x128xf32>
    %621 = vector.broadcast %564 : vector<1x128xf32> to vector<8x128xf32>
    %622 = arith.mulf %620, %621 : vector<8x128xf32>
    %623 = arith.mulf %622, %577 : vector<8x128xf32>
    %624 = arith.addf %533, %623 : vector<8x128xf32>
    %625 = arith.mulf %622, %579 : vector<8x128xf32>
    %626 = arith.addf %535, %625 : vector<8x128xf32>
    %627 = arith.mulf %622, %581 : vector<8x128xf32>
    %628 = arith.addf %537, %627 : vector<8x128xf32>
    %c6_i32 = arith.constant 6 : i32
    %629 = arith.index_cast %c6_i32 : i32 to index
    %c0_123 = arith.constant 0 : index
    %630 = vector.load %arg2[%629, %c0_123] : memref<32x128xf32, #tpu.memory_space<vmem>>, vector<1x128xf32>
    %c8_i32_124 = arith.constant 8 : i32
    %631 = arith.addi %c8_i32_124, %c6_i32 : i32
    %632 = arith.index_cast %631 : i32 to index
    %c0_125 = arith.constant 0 : index
    %633 = vector.load %arg2[%632, %c0_125] : memref<32x128xf32, #tpu.memory_space<vmem>>, vector<1x128xf32>
    %c16_i32_126 = arith.constant 16 : i32
    %634 = arith.addi %c16_i32_126, %c6_i32 : i32
    %635 = arith.index_cast %634 : i32 to index
    %c0_127 = arith.constant 0 : index
    %636 = vector.load %arg2[%635, %c0_127] : memref<32x128xf32, #tpu.memory_space<vmem>>, vector<1x128xf32>
    %c24_i32_128 = arith.constant 24 : i32
    %637 = arith.addi %c24_i32_128, %c6_i32 : i32
    %638 = arith.index_cast %637 : i32 to index
    %c0_129 = arith.constant 0 : index
    %639 = vector.load %arg2[%638, %c0_129] : memref<32x128xf32, #tpu.memory_space<vmem>>, vector<1x128xf32>
    %640 = arith.subf %630, %2 : vector<1x128xf32>
    %641 = arith.subf %633, %3 : vector<1x128xf32>
    %642 = arith.subf %636, %4 : vector<1x128xf32>
    %643 = arith.mulf %640, %640 : vector<1x128xf32>
    %644 = arith.mulf %641, %641 : vector<1x128xf32>
    %645 = arith.addf %643, %644 : vector<1x128xf32>
    %646 = arith.mulf %642, %642 : vector<1x128xf32>
    %647 = arith.addf %645, %646 : vector<1x128xf32>
    %cst_130 = arith.constant 5.000000e-01 : f32
    %648 = vector.broadcast %cst_130 : f32 to vector<1x128xf32>
    %649 = arith.cmpf ogt, %639, %648 : vector<1x128xf32>
    %cst_131 = arith.constant 14.2217989 : f32
    %650 = vector.broadcast %cst_131 : f32 to vector<1x128xf32>
    %651 = arith.cmpf olt, %647, %650 : vector<1x128xf32>
    %652 = arith.andi %649, %651 : vector<1x128xi1>
    %cst_132 = arith.constant 3.55544972 : f32
    %653 = vector.broadcast %cst_132 : f32 to vector<1x128xf32>
    %654 = arith.select %652, %647, %653 : vector<1x128xi1>, vector<1x128xf32>
    %655 = math.rsqrt %654 : vector<1x128xf32>
    %656 = arith.mulf %654, %655 : vector<1x128xf32>
    %cst_133 = arith.constant 3.771180e+00 : f32
    %657 = vector.broadcast %cst_133 : f32 to vector<1x128xf32>
    %658 = arith.subf %656, %657 : vector<1x128xf32>
    %cst_134 = arith.constant -1.000000e-03 : f32
    %659 = vector.broadcast %cst_134 : f32 to vector<1x128xf32>
    %660 = arith.minimumf %658, %659 : vector<1x128xf32>
    %cst_135 = arith.constant 2.514120e+00 : f32
    %661 = vector.broadcast %cst_135 : f32 to vector<1x128xf32>
    %662 = arith.divf %661, %660 : vector<1x128xf32>
    %663 = math.exp %662 : vector<1x128xf32>
    %664 = arith.extui %652 : vector<1x128xi1> to vector<1x128xi32>
    %665 = arith.sitofp %664 : vector<1x128xi32> to vector<1x128xf32>
    %666 = arith.mulf %663, %665 : vector<1x128xf32>
    %667 = vector.broadcast %630 : vector<1x128xf32> to vector<8x128xf32>
    %668 = arith.subf %667, %5 : vector<8x128xf32>
    %669 = vector.broadcast %633 : vector<1x128xf32> to vector<8x128xf32>
    %670 = arith.subf %669, %6 : vector<8x128xf32>
    %671 = vector.broadcast %636 : vector<1x128xf32> to vector<8x128xf32>
    %672 = arith.subf %671, %7 : vector<8x128xf32>
    %673 = arith.mulf %668, %668 : vector<8x128xf32>
    %674 = arith.mulf %670, %670 : vector<8x128xf32>
    %675 = arith.addf %673, %674 : vector<8x128xf32>
    %676 = arith.mulf %672, %672 : vector<8x128xf32>
    %677 = arith.addf %675, %676 : vector<8x128xf32>
    %678 = arith.mulf %656, %656 : vector<1x128xf32>
    %679 = vector.broadcast %678 : vector<1x128xf32> to vector<8x128xf32>
    %680 = arith.addf %75, %679 : vector<8x128xf32>
    %681 = arith.subf %680, %677 : vector<8x128xf32>
    %682 = arith.mulf %681, %77 : vector<8x128xf32>
    %683 = vector.broadcast %655 : vector<1x128xf32> to vector<8x128xf32>
    %684 = arith.mulf %682, %683 : vector<8x128xf32>
    %cst_136 = arith.constant -0.333333343 : f32
    %685 = vector.broadcast %cst_136 : f32 to vector<8x128xf32>
    %686 = arith.subf %684, %685 : vector<8x128xf32>
    %687 = vector.broadcast %c6_i32 : i32 to vector<8x1xi32>
    %688 = arith.cmpi ne, %81, %687 : vector<8x1xi32>
    %689 = arith.extui %688 : vector<8x1xi1> to vector<8x1xi32>
    %690 = arith.sitofp %689 : vector<8x1xi32> to vector<8x1xf32>
    %cst_137 = arith.constant 4.553220e+01 : f32
    %691 = vector.broadcast %cst_137 : f32 to vector<8x128xf32>
    %692 = arith.mulf %691, %686 : vector<8x128xf32>
    %693 = vector.broadcast %666 : vector<1x128xf32> to vector<8x128xf32>
    %694 = arith.mulf %74, %693 : vector<8x128xf32>
    %695 = arith.mulf %692, %694 : vector<8x128xf32>
    %696 = vector.broadcast %690 : vector<8x1xf32> to vector<8x128xf32>
    %697 = arith.mulf %695, %696 : vector<8x128xf32>
    %698 = arith.mulf %697, %686 : vector<8x128xf32>
    %699 = arith.addf %608, %698 : vector<8x128xf32>
    %700 = arith.mulf %684, %33 : vector<8x128xf32>
    %701 = vector.broadcast %655 : vector<1x128xf32> to vector<8x128xf32>
    %702 = arith.subf %701, %700 : vector<8x128xf32>
    %cst_138 = arith.constant 2.000000e+00 : f32
    %703 = vector.broadcast %cst_138 : f32 to vector<8x128xf32>
    %704 = arith.mulf %703, %702 : vector<8x128xf32>
    %705 = arith.mulf %80, %686 : vector<8x128xf32>
    %706 = arith.subf %704, %705 : vector<8x128xf32>
    %707 = arith.mulf %697, %706 : vector<8x128xf32>
    %708 = arith.addf %617, %707 : vector<8x128xf32>
    %cst_139 = arith.constant 2.000000e+00 : f32
    %709 = vector.broadcast %cst_139 : f32 to vector<8x128xf32>
    %710 = arith.mulf %709, %697 : vector<8x128xf32>
    %711 = arith.mulf %710, %33 : vector<8x128xf32>
    %712 = vector.broadcast %655 : vector<1x128xf32> to vector<8x128xf32>
    %713 = arith.mulf %711, %712 : vector<8x128xf32>
    %714 = arith.mulf %713, %668 : vector<8x128xf32>
    %715 = arith.addf %624, %714 : vector<8x128xf32>
    %716 = arith.mulf %713, %670 : vector<8x128xf32>
    %717 = arith.addf %626, %716 : vector<8x128xf32>
    %718 = arith.mulf %713, %672 : vector<8x128xf32>
    %719 = arith.addf %628, %718 : vector<8x128xf32>
    %c7_i32 = arith.constant 7 : i32
    %720 = arith.index_cast %c7_i32 : i32 to index
    %c0_140 = arith.constant 0 : index
    %721 = vector.load %arg2[%720, %c0_140] : memref<32x128xf32, #tpu.memory_space<vmem>>, vector<1x128xf32>
    %c8_i32_141 = arith.constant 8 : i32
    %722 = arith.addi %c8_i32_141, %c7_i32 : i32
    %723 = arith.index_cast %722 : i32 to index
    %c0_142 = arith.constant 0 : index
    %724 = vector.load %arg2[%723, %c0_142] : memref<32x128xf32, #tpu.memory_space<vmem>>, vector<1x128xf32>
    %c16_i32_143 = arith.constant 16 : i32
    %725 = arith.addi %c16_i32_143, %c7_i32 : i32
    %726 = arith.index_cast %725 : i32 to index
    %c0_144 = arith.constant 0 : index
    %727 = vector.load %arg2[%726, %c0_144] : memref<32x128xf32, #tpu.memory_space<vmem>>, vector<1x128xf32>
    %c24_i32_145 = arith.constant 24 : i32
    %728 = arith.addi %c24_i32_145, %c7_i32 : i32
    %729 = arith.index_cast %728 : i32 to index
    %c0_146 = arith.constant 0 : index
    %730 = vector.load %arg2[%729, %c0_146] : memref<32x128xf32, #tpu.memory_space<vmem>>, vector<1x128xf32>
    %731 = arith.subf %721, %2 : vector<1x128xf32>
    %732 = arith.subf %724, %3 : vector<1x128xf32>
    %733 = arith.subf %727, %4 : vector<1x128xf32>
    %734 = arith.mulf %731, %731 : vector<1x128xf32>
    %735 = arith.mulf %732, %732 : vector<1x128xf32>
    %736 = arith.addf %734, %735 : vector<1x128xf32>
    %737 = arith.mulf %733, %733 : vector<1x128xf32>
    %738 = arith.addf %736, %737 : vector<1x128xf32>
    %cst_147 = arith.constant 5.000000e-01 : f32
    %739 = vector.broadcast %cst_147 : f32 to vector<1x128xf32>
    %740 = arith.cmpf ogt, %730, %739 : vector<1x128xf32>
    %cst_148 = arith.constant 14.2217989 : f32
    %741 = vector.broadcast %cst_148 : f32 to vector<1x128xf32>
    %742 = arith.cmpf olt, %738, %741 : vector<1x128xf32>
    %743 = arith.andi %740, %742 : vector<1x128xi1>
    %cst_149 = arith.constant 3.55544972 : f32
    %744 = vector.broadcast %cst_149 : f32 to vector<1x128xf32>
    %745 = arith.select %743, %738, %744 : vector<1x128xi1>, vector<1x128xf32>
    %746 = math.rsqrt %745 : vector<1x128xf32>
    %747 = arith.mulf %745, %746 : vector<1x128xf32>
    %cst_150 = arith.constant 3.771180e+00 : f32
    %748 = vector.broadcast %cst_150 : f32 to vector<1x128xf32>
    %749 = arith.subf %747, %748 : vector<1x128xf32>
    %cst_151 = arith.constant -1.000000e-03 : f32
    %750 = vector.broadcast %cst_151 : f32 to vector<1x128xf32>
    %751 = arith.minimumf %749, %750 : vector<1x128xf32>
    %cst_152 = arith.constant 2.514120e+00 : f32
    %752 = vector.broadcast %cst_152 : f32 to vector<1x128xf32>
    %753 = arith.divf %752, %751 : vector<1x128xf32>
    %754 = math.exp %753 : vector<1x128xf32>
    %755 = arith.extui %743 : vector<1x128xi1> to vector<1x128xi32>
    %756 = arith.sitofp %755 : vector<1x128xi32> to vector<1x128xf32>
    %757 = arith.mulf %754, %756 : vector<1x128xf32>
    %758 = vector.broadcast %721 : vector<1x128xf32> to vector<8x128xf32>
    %759 = arith.subf %758, %5 : vector<8x128xf32>
    %760 = vector.broadcast %724 : vector<1x128xf32> to vector<8x128xf32>
    %761 = arith.subf %760, %6 : vector<8x128xf32>
    %762 = vector.broadcast %727 : vector<1x128xf32> to vector<8x128xf32>
    %763 = arith.subf %762, %7 : vector<8x128xf32>
    %764 = arith.mulf %759, %759 : vector<8x128xf32>
    %765 = arith.mulf %761, %761 : vector<8x128xf32>
    %766 = arith.addf %764, %765 : vector<8x128xf32>
    %767 = arith.mulf %763, %763 : vector<8x128xf32>
    %768 = arith.addf %766, %767 : vector<8x128xf32>
    %769 = arith.mulf %747, %747 : vector<1x128xf32>
    %770 = vector.broadcast %769 : vector<1x128xf32> to vector<8x128xf32>
    %771 = arith.addf %75, %770 : vector<8x128xf32>
    %772 = arith.subf %771, %768 : vector<8x128xf32>
    %773 = arith.mulf %772, %77 : vector<8x128xf32>
    %774 = vector.broadcast %746 : vector<1x128xf32> to vector<8x128xf32>
    %775 = arith.mulf %773, %774 : vector<8x128xf32>
    %cst_153 = arith.constant -0.333333343 : f32
    %776 = vector.broadcast %cst_153 : f32 to vector<8x128xf32>
    %777 = arith.subf %775, %776 : vector<8x128xf32>
    %778 = vector.broadcast %c7_i32 : i32 to vector<8x1xi32>
    %779 = arith.cmpi ne, %81, %778 : vector<8x1xi32>
    %780 = arith.extui %779 : vector<8x1xi1> to vector<8x1xi32>
    %781 = arith.sitofp %780 : vector<8x1xi32> to vector<8x1xf32>
    %cst_154 = arith.constant 4.553220e+01 : f32
    %782 = vector.broadcast %cst_154 : f32 to vector<8x128xf32>
    %783 = arith.mulf %782, %777 : vector<8x128xf32>
    %784 = vector.broadcast %757 : vector<1x128xf32> to vector<8x128xf32>
    %785 = arith.mulf %74, %784 : vector<8x128xf32>
    %786 = arith.mulf %783, %785 : vector<8x128xf32>
    %787 = vector.broadcast %781 : vector<8x1xf32> to vector<8x128xf32>
    %788 = arith.mulf %786, %787 : vector<8x128xf32>
    %789 = arith.mulf %788, %777 : vector<8x128xf32>
    %790 = arith.addf %699, %789 : vector<8x128xf32>
    %791 = arith.mulf %775, %33 : vector<8x128xf32>
    %792 = vector.broadcast %746 : vector<1x128xf32> to vector<8x128xf32>
    %793 = arith.subf %792, %791 : vector<8x128xf32>
    %cst_155 = arith.constant 2.000000e+00 : f32
    %794 = vector.broadcast %cst_155 : f32 to vector<8x128xf32>
    %795 = arith.mulf %794, %793 : vector<8x128xf32>
    %796 = arith.mulf %80, %777 : vector<8x128xf32>
    %797 = arith.subf %795, %796 : vector<8x128xf32>
    %798 = arith.mulf %788, %797 : vector<8x128xf32>
    %799 = arith.addf %708, %798 : vector<8x128xf32>
    %cst_156 = arith.constant 2.000000e+00 : f32
    %800 = vector.broadcast %cst_156 : f32 to vector<8x128xf32>
    %801 = arith.mulf %800, %788 : vector<8x128xf32>
    %802 = arith.mulf %801, %33 : vector<8x128xf32>
    %803 = vector.broadcast %746 : vector<1x128xf32> to vector<8x128xf32>
    %804 = arith.mulf %802, %803 : vector<8x128xf32>
    %805 = arith.mulf %804, %759 : vector<8x128xf32>
    %806 = arith.addf %715, %805 : vector<8x128xf32>
    %807 = arith.mulf %804, %761 : vector<8x128xf32>
    %808 = arith.addf %717, %807 : vector<8x128xf32>
    %809 = arith.mulf %804, %763 : vector<8x128xf32>
    %810 = arith.addf %719, %809 : vector<8x128xf32>
    %c8_i32_157 = arith.constant 8 : i32
    %cst_158 = arith.constant 5.000000e-01 : f32
    %811 = vector.broadcast %cst_158 : f32 to vector<8x128xf32>
    %812 = arith.mulf %811, %70 : vector<8x128xf32>
    %813 = arith.addf %812, %799 : vector<8x128xf32>
    %814 = arith.mulf %813, %35 : vector<8x128xf32>
    %815 = arith.addf %814, %806 : vector<8x128xf32>
    %816 = arith.mulf %813, %36 : vector<8x128xf32>
    %817 = arith.addf %816, %808 : vector<8x128xf32>
    %818 = arith.mulf %813, %37 : vector<8x128xf32>
    %819 = arith.addf %818, %810 : vector<8x128xf32>
    %820 = arith.mulf %813, %35 : vector<8x128xf32>
    %cst_159 = arith.constant dense<0.000000e+00> : vector<128xf32>
    %821 = vector.multi_reduction <add>, %820, %cst_159 [0] : vector<8x128xf32> to vector<128xf32>
    %822 = vector.shape_cast %821 : vector<128xf32> to vector<1x128xf32>
    %823 = arith.mulf %813, %36 : vector<8x128xf32>
    %cst_160 = arith.constant dense<0.000000e+00> : vector<128xf32>
    %824 = vector.multi_reduction <add>, %823, %cst_160 [0] : vector<8x128xf32> to vector<128xf32>
    %825 = vector.shape_cast %824 : vector<128xf32> to vector<1x128xf32>
    %826 = arith.mulf %813, %37 : vector<8x128xf32>
    %cst_161 = arith.constant dense<0.000000e+00> : vector<128xf32>
    %827 = vector.multi_reduction <add>, %826, %cst_161 [0] : vector<8x128xf32> to vector<128xf32>
    %828 = vector.shape_cast %827 : vector<128xf32> to vector<1x128xf32>
    %cst_162 = arith.constant dense<0.000000e+00> : vector<128xf32>
    %829 = vector.multi_reduction <add>, %58, %cst_162 [0] : vector<8x128xf32> to vector<128xf32>
    %830 = vector.shape_cast %829 : vector<128xf32> to vector<1x128xf32>
    %cst_163 = arith.constant dense<0.000000e+00> : vector<128xf32>
    %831 = vector.multi_reduction <add>, %790, %cst_163 [0] : vector<8x128xf32> to vector<128xf32>
    %832 = vector.shape_cast %831 : vector<128xf32> to vector<1x128xf32>
    %833 = arith.addf %830, %832 : vector<1x128xf32>
    %cst_164 = arith.constant 5.000000e-01 : f32
    %834 = vector.broadcast %cst_164 : f32 to vector<1x128xf32>
    %835 = arith.mulf %834, %833 : vector<1x128xf32>
    %cst_165 = arith.constant 0.000000e+00 : f32
    %836 = vector.broadcast %cst_165 : f32 to vector<4x128xf32>
    %837 = tpu.concatenate %822, %825, %828, %835, %836 in 0 : vector<1x128xf32>, vector<1x128xf32>, vector<1x128xf32>, vector<1x128xf32>, vector<4x128xf32> -> vector<8x128xf32>
    %c0_166 = arith.constant 0 : index
    %c0_167 = arith.constant 0 : index
    %838 = vector.load %arg3[%c0_166, %c0_167] : memref<8x128xf32, #tpu.memory_space<vmem>>, vector<8x128xf32>
    tpu.vector_store %arg3[%c0_166, %c0_167], %837 {strides = array<i32>} : memref<8x128xf32, #tpu.memory_space<vmem>>, vector<8x128xf32>,
    %cst_168 = arith.constant 0.000000e+00 : f32
    %839 = vector.broadcast %cst_168 : f32 to vector<8x128xf32>
    %840 = arith.subf %839, %815 : vector<8x128xf32>
    %c0_169 = arith.constant 0 : index
    %c0_170 = arith.constant 0 : index
    %841 = vector.load %arg4[%c0_169, %c0_170] : memref<24x128xf32, #tpu.memory_space<vmem>>, vector<8x128xf32>
    tpu.vector_store %arg4[%c0_169, %c0_170], %840 {strides = array<i32>} : memref<24x128xf32, #tpu.memory_space<vmem>>, vector<8x128xf32>,
    %cst_171 = arith.constant 0.000000e+00 : f32
    %842 = vector.broadcast %cst_171 : f32 to vector<8x128xf32>
    %843 = arith.subf %842, %817 : vector<8x128xf32>
    %c8_172 = arith.constant 8 : index
    %c0_173 = arith.constant 0 : index
    %844 = vector.load %arg4[%c8_172, %c0_173] : memref<24x128xf32, #tpu.memory_space<vmem>>, vector<8x128xf32>
    tpu.vector_store %arg4[%c8_172, %c0_173], %843 {strides = array<i32>} : memref<24x128xf32, #tpu.memory_space<vmem>>, vector<8x128xf32>,
    %cst_174 = arith.constant 0.000000e+00 : f32
    %845 = vector.broadcast %cst_174 : f32 to vector<8x128xf32>
    %846 = arith.subf %845, %819 : vector<8x128xf32>
    %c16_175 = arith.constant 16 : index
    %c0_176 = arith.constant 0 : index
    %847 = vector.load %arg4[%c16_175, %c0_176] : memref<24x128xf32, #tpu.memory_space<vmem>>, vector<8x128xf32>
    tpu.vector_store %arg4[%c16_175, %c0_176], %846 {strides = array<i32>} : memref<24x128xf32, #tpu.memory_space<vmem>>, vector<8x128xf32>,
    return
  }
  func.func @transform_0(%arg0: i32) -> (i32, i32) {
    %c0_i32 = arith.constant 0 : i32
    %c0_i32_0 = arith.constant 0 : i32
    return %c0_i32, %arg0 : i32, i32
  }
  func.func @transform_1(%arg0: i32) -> (i32, i32) {
    %c0_i32 = arith.constant 0 : i32
    %c0_i32_0 = arith.constant 0 : i32
    return %c0_i32, %arg0 : i32, i32
  }
  func.func @transform_2(%arg0: i32) -> (i32, i32) {
    %c0_i32 = arith.constant 0 : i32
    %c0_i32_0 = arith.constant 0 : i32
    return %c0_i32, %arg0 : i32, i32
  }
  func.func @transform_3(%arg0: i32) -> (i32, i32) {
    %c0_i32 = arith.constant 0 : i32
    %c0_i32_0 = arith.constant 0 : i32
    return %c0_i32, %arg0 : i32, i32
  }
}

</mosaic_0001>

<llo_original>
// kernel: sw_forward.1
$region0: #{sw_forward.1}
  #allocation0 [shape = 'u32[]', space=smem, size = 0x4, offset = 0x4, fixed_abs, tag = 'smem constant byte address 0x4 - core index']
  #allocation1 [shape = 'u32[72,128]{1,0:T(1,128)}', space=vmem, size = 0x9000, scoped, tag = 'internal scratch']
  %s0 = inlined_call_operand.vmem [shape: f32[8,128], index: 0, kind: input, shape index: {}]
  %s1 = inlined_call_operand.vmem [shape: f32[32,128], index: 1, kind: input, shape index: {}]
  %s2 = inlined_call_operand.vmem [shape: f32[8,128], index: 2, kind: output, shape index: {0}]
  %s3 = inlined_call_operand.vmem [shape: f32[24,128], index: 3, kind: output, shape index: {1}]
  %4 = xla_tuple %s2, %s3
  %s5 = sld [smem:[#allocation0]]
  $region26: #{sw_forward.1} parent=0
    _
  %s7 = ssub.s32 1, %s5
  %s8 = scalar_select 0, %s7, %s5
  // Predicated region
  $region2: #{sw_forward.1} parent=0 // pred_check
    _
  $region3: #{sw_forward.1} parent=0 // pred_check_branch
    %10 = sbr.rel (0) target = $region5
  $region4: #{sw_forward.1} parent=0 // pred_region
    _
  $region5: #{sw_forward.1} parent=0 // pred_fallthru
    _
  // Predicated region
  $region6: #{sw_forward.1} parent=0 // pred_check
    _
  $region7: #{sw_forward.1} parent=0 // pred_check_branch
    %12 = sbr.rel (0) target = $region9
  $region8: #{sw_forward.1} parent=0 // pred_region
    _
  $region9: #{sw_forward.1} parent=0 // pred_fallthru
    _
  %v13 = vld [vmem:[%s0] sm:$0xff]
  %v14 = vld [vmem:[%s1] sm:$0xff]
  %v15 = vld [vmem:[%s1 + $0x8] sm:$0xff]
  %v16 = vld [vmem:[%s1 + $0x10] sm:$0xff]
  %v17 = vld [vmem:[%s1 + $0x18] sm:$0xff]
  %v18 = vperm.slane %v13, 1
  %v19 = vsub.f32 %v14, %v18
  %v20 = vperm.slane %v13, 2
  %v21 = vsub.f32 %v15, %v20
  %v22 = vperm.slane %v13, 3
  %v23 = vsub.f32 %v16, %v22
  %v24 = vmul.f32 %v19, %v19
  %v25 = vmul.f32 %v21, %v21
  %v26 = vadd.f32 %v24, %v25
  %v27 = vmul.f32 %v23, %v23
  %v28 = vadd.f32 %v26, %v27
  %vm29 = vcmp.gt.f32.partialorder %v17, 0.5
  %vm30 = vcmp.lt.f32.partialorder %v28, 14.221799
  %vm31 = vmand %vm29, %vm30
  %vm32 = vcmp.gt.f32.partialorder %v13, 0.5
  %v33 = vsel %vm32, 1, 0
  %v34 = vperm.slane %v33, 0
  %vm35 = vcmp.eq.s32.totalorder %v34, 1
  %vm36 = vmand %vm31, %vm35
  %v37 = vsel %vm36, 1, 0
  %v38 = vcvt.s32.f32 %v37
  %v39 = vsel %vm36, %v28, 3.5554497
  %v40 = vrsqrt.pop %v39
  %v41 = vmul.f32 %v40, %v39
  %v42 = vmul.f32 %v41, %v40
  %v43 = vmul.f32 0.5, %v42
  %v44 = vsub.f32 1.5, %v43
  %v45 = vmul.f32 %v40, %v44
  %vm46 = vweird.f32 %v39
  %vm47 = vweird.f32 %v40
  %vm48 = vmor %vm46, %vm47
  %v49 = vsel %vm48, %v40, %v45
  %v50 = vmul.f32 %v39, %v49
  %v51 = vmul.f32 %v19, %v49
  %v52 = vmul.f32 %v21, %v49
  %v53 = vmul.f32 %v23, %v49
  %v54 = vsub.f32 %v50, 3.77118
  %v55 = vmin.f32 %v54, -0.001
  %v56 = vrcp.pop %v55
  %v57 = vmul.f32 %v55, %v56
  %v58 = vsub.f32 1.0, %v57
  %v59 = vmul.f32 %v56, %v58
  %v60 = vadd.f32 %v56, %v59
  %vm61 = vweird.f32 %v55
  %vm62 = vweird.f32 %v56
  %vm63 = vmor %vm61, %vm62
  %v64 = vsel %vm63, %v56, %v60
  %v65 = vand.u32 2147483647, %v55
  %vm66 = vcmp.eq.f32.partialorder %v65, 8.507059e+37
  %v67 = vand.u32 %v55, 2147483648
  %v68 = vor.u32 1.1754944e-38, %v67
  %v69 = vsel %vm66, %v68, %v64
  %v70 = vmul.f32 1.0, %v69
  %v71 = vmul.f32 %v49, 2.0951
  %v72 = vmul.f32 %v71, %v71
  %v73 = vmul.f32 %v72, %v72
  %v74 = vmul.f32 %v73, 0.6022245
  %v75 = vsub.f32 %v74, 1.0
  %v76 = vmul.f32 %v70, 2.0951
  %v77 = vmul.f32 %v76, 1.442695
  %v78 = vpow.pop %v77
  %v79 = vmul.f32 %v75, 15.284848
  %v80 = vmul.f32 %v79, %v78
  %v81 = vmul.f32 %v80, %v38
  %v82 = vmul.f32 %v78, 15.284848
  %v83 = vmul.f32 %v73, -2.408898
  %v84 = vmul.f32 %v83, %v49
  %v85 = vmul.f32 %v75, 2.0951
  %v86 = vmul.f32 %v85, %v70
  %v87 = vmul.f32 %v86, %v70
  %v88 = vsub.f32 %v84, %v87
  %v89 = vmul.f32 %v82, %v88
  %v90 = vmul.f32 %v89, %v38
  %v91 = vmul.f32 %v70, 2.51412
  %v92 = vmul.f32 %v91, 1.442695
  %v93 = vpow.pop %v92
  %v94 = vmul.f32 %v93, %v38
  %v95 = vmul.f32 %v50, %v50
  %v96 = vmul.f32 %v49, 0.5
  %v97 = vmul.f32 %v91, %v70
  %v98 = vlaneseq
  %v99 = vshrl.u32 %v98, 7
  %v100 = vld [vmem:[%s1] sm:$0x1]
  %v101 = vld [vmem:[%s1 + $0x8] sm:$0x1]
  %v102 = vld [vmem:[%s1 + $0x10] sm:$0x1]
  %v103 = vld [vmem:[%s1 + $0x18] sm:$0x1]
  %v105 = vrot.slane %v13, 1
  %v107 = vsub.f32 %v100, %v105
  %v108 = vrot.slane %v13, 2
  %v110 = vsub.f32 %v101, %v108
  %v111 = vrot.slane %v13, 3
  %v113 = vsub.f32 %v102, %v111
  %v114 = vmul.f32 %v107, %v107
  %v115 = vmul.f32 %v110, %v110
  %v116 = vadd.f32 %v114, %v115
  %v117 = vmul.f32 %v113, %v113
  %v118 = vadd.f32 %v116, %v117
  %vm119 = vcmp.gt.f32.partialorder %v103, 0.5
  %vm120 = vcmp.lt.f32.partialorder %v118, 14.221799
  %vm121 = vmand %vm119, %vm120
  %v122 = vsel %vm121, %v118, 3.5554497
  %v123 = vrsqrt.pop %v122
  %v124 = vmul.f32 %v123, %v122
  %v125 = vmul.f32 %v124, %v123
  %v126 = vmul.f32 0.5, %v125
  %v127 = vsub.f32 1.5, %v126
  %v128 = vmul.f32 %v123, %v127
  %vm129 = vweird.f32 %v122
  %vm130 = vweird.f32 %v123
  %vm131 = vmor %vm129, %vm130
  %v132 = vsel %vm131, %v123, %v128
  %v133 = vmul.f32 %v122, %v132
  %v134 = vsub.f32 %v133, 3.77118
  %v135 = vmin.f32 %v134, -0.001
  %v136 = vrcp.pop %v135
  %v137 = vmul.f32 %v135, %v136
  %v138 = vsub.f32 1.0, %v137
  %v139 = vmul.f32 %v136, %v138
  %v140 = vadd.f32 %v136, %v139
  %vm141 = vweird.f32 %v135
  %vm142 = vweird.f32 %v136
  %vm143 = vmor %vm141, %vm142
  %v144 = vsel %vm143, %v136, %v140
  %v145 = vand.u32 2147483647, %v135
  %vm146 = vcmp.eq.f32.partialorder %v145, 8.507059e+37
  %v147 = vand.u32 %v135, 2147483648
  %v148 = vor.u32 1.1754944e-38, %v147
  %v149 = vsel %vm146, %v148, %v144
  %v150 = vmul.f32 2.51412, %v149
  %v151 = vmul.f32 %v150, 1.442695
  %v152 = vpow.pop %v151
  %v153 = vsel %vm121, 1, 0
  %v154 = vcvt.s32.f32 %v153
  %v155 = vmul.f32 %v152, %v154
  %v156 = vperm.slane %v100, 0
  %v157 = vsub.f32 %v156, %v14
  %v158 = vperm.slane %v101, 0
  %v159 = vsub.f32 %v158, %v15
  %v160 = vperm.slane %v102, 0
  %v161 = vsub.f32 %v160, %v16
  %v162 = vmul.f32 %v157, %v157
  %v163 = vmul.f32 %v159, %v159
  %v164 = vadd.f32 %v162, %v163
  %v165 = vmul.f32 %v161, %v161
  %v166 = vadd.f32 %v164, %v165
  %v167 = vmul.f32 %v133, %v133
  %v168 = vperm.slane %v167, 0
  %v169 = vadd.f32 %v95, %v168
  %v170 = vsub.f32 %v169, %v166
  %v171 = vmul.f32 %v170, %v96
  %v172 = vperm.slane %v132, 0
  %v173 = vmul.f32 %v171, %v172
  %v174 = vsub.f32 %v173, -0.33333334
  %vm175 = vcmp.ne.s32.totalorder %v99, 0
  %v176 = vsel %vm175, 1, 0
  %v177 = vcvt.s32.f32 %v176
  %v178 = vmul.f32 %v174, 45.5322
  %v179 = vperm.slane %v155, 0
  %v180 = vmul.f32 %v94, %v179
  %v181 = vmul.f32 %v178, %v180
  %v182 = vmul.f32 %v181, %v177
  %v183 = vmul.f32 %v182, %v174
  %v184 = vadd.f32 %v183, 0.0
  %v185 = vmul.f32 %v173, %v49
  %v186 = vsub.f32 %v172, %v185
  %v187 = vmul.f32 %v186, 2.0
  %v188 = vmul.f32 %v97, %v174
  %v189 = vsub.f32 %v187, %v188
  %v190 = vmul.f32 %v182, %v189
  %v191 = vadd.f32 %v190, 0.0
  %v192 = vmul.f32 %v182, 2.0
  %v193 = vmul.f32 %v192, %v49
  %v194 = vmul.f32 %v193, %v172
  %v195 = vmul.f32 %v194, %v157
  %v196 = vadd.f32 %v195, 0.0
  %v197 = vmul.f32 %v194, %v159
  %v198 = vadd.f32 %v197, 0.0
  %v199 = vmul.f32 %v194, %v161
  %v200 = vadd.f32 %v199, 0.0
  %v201 = vld [vmem:[%s1 + $0x1] sm:$0x1]
  %v202 = vld [vmem:[%s1 + $0x9] sm:$0x1]
  %v203 = vld [vmem:[%s1 + $0x11] sm:$0x1]
  %v204 = vld [vmem:[%s1 + $0x19] sm:$0x1]
  %v205 = vsub.f32 %v201, %v105
  %v206 = vsub.f32 %v202, %v108
  %v207 = vsub.f32 %v203, %v111
  %v208 = vmul.f32 %v205, %v205
  %v209 = vmul.f32 %v206, %v206
  %v210 = vadd.f32 %v208, %v209
  %v211 = vmul.f32 %v207, %v207
  %v212 = vadd.f32 %v210, %v211
  %vm213 = vcmp.gt.f32.partialorder %v204, 0.5
  %vm214 = vcmp.lt.f32.partialorder %v212, 14.221799
  %vm215 = vmand %vm213, %vm214
  %v216 = vsel %vm215, %v212, 3.5554497
  %v217 = vrsqrt.pop %v216
  %v218 = vmul.f32 %v217, %v216
  %v219 = vmul.f32 %v218, %v217
  %v220 = vmul.f32 0.5, %v219
  %v221 = vsub.f32 1.5, %v220
  %v222 = vmul.f32 %v217, %v221
  %vm223 = vweird.f32 %v216
  %vm224 = vweird.f32 %v217
  %vm225 = vmor %vm223, %vm224
  %v226 = vsel %vm225, %v217, %v222
  %v227 = vmul.f32 %v216, %v226
  %v228 = vsub.f32 %v227, 3.77118
  %v229 = vmin.f32 %v228, -0.001
  %v230 = vrcp.pop %v229
  %v231 = vmul.f32 %v229, %v230
  %v232 = vsub.f32 1.0, %v231
  %v233 = vmul.f32 %v230, %v232
  %v234 = vadd.f32 %v230, %v233
  %vm235 = vweird.f32 %v229
  %vm236 = vweird.f32 %v230
  %vm237 = vmor %vm235, %vm236
  %v238 = vsel %vm237, %v230, %v234
  %v239 = vand.u32 2147483647, %v229
  %vm240 = vcmp.eq.f32.partialorder %v239, 8.507059e+37
  %v241 = vand.u32 %v229, 2147483648
  %v242 = vor.u32 1.1754944e-38, %v241
  %v243 = vsel %vm240, %v242, %v238
  %v244 = vmul.f32 2.51412, %v243
  %v245 = vmul.f32 %v244, 1.442695
  %v246 = vpow.pop %v245
  %v247 = vsel %vm215, 1, 0
  %v248 = vcvt.s32.f32 %v247
  %v249 = vmul.f32 %v246, %v248
  %v250 = vperm.slane %v201, 0
  %v251 = vsub.f32 %v250, %v14
  %v252 = vperm.slane %v202, 0
  %v253 = vsub.f32 %v252, %v15
  %v254 = vperm.slane %v203, 0
  %v255 = vsub.f32 %v254, %v16
  %v256 = vmul.f32 %v251, %v251
  %v257 = vmul.f32 %v253, %v253
  %v258 = vadd.f32 %v256, %v257
  %v259 = vmul.f32 %v255, %v255
  %v260 = vadd.f32 %v258, %v259
  %v261 = vmul.f32 %v227, %v227
  %v262 = vperm.slane %v261, 0
  %v263 = vadd.f32 %v95, %v262
  %v264 = vsub.f32 %v263, %v260
  %v265 = vmul.f32 %v264, %v96
  %v266 = vperm.slane %v226, 0
  %v267 = vmul.f32 %v265, %v266
  %v268 = vsub.f32 %v267, -0.33333334
  %vm269 = vcmp.ne.s32.totalorder %v99, 1
  %v270 = vsel %vm269, 1, 0
  %v271 = vcvt.s32.f32 %v270
  %v272 = vmul.f32 %v268, 45.5322
  %v273 = vperm.slane %v249, 0
  %v274 = vmul.f32 %v94, %v273
  %v275 = vmul.f32 %v272, %v274
  %v276 = vmul.f32 %v275, %v271
  %v277 = vmul.f32 %v276, %v268
  %v278 = vadd.f32 %v184, %v277
  %v279 = vmul.f32 %v267, %v49
  %v280 = vsub.f32 %v266, %v279
  %v281 = vmul.f32 %v280, 2.0
  %v282 = vmul.f32 %v97, %v268
  %v283 = vsub.f32 %v281, %v282
  %v284 = vmul.f32 %v276, %v283
  %v285 = vadd.f32 %v191, %v284
  %v286 = vmul.f32 %v276, 2.0
  %v287 = vmul.f32 %v286, %v49
  %v288 = vmul.f32 %v287, %v266
  %v289 = vmul.f32 %v288, %v251
  %v290 = vadd.f32 %v196, %v289
  %v291 = vmul.f32 %v288, %v253
  %v292 = vadd.f32 %v198, %v291
  %v293 = vmul.f32 %v288, %v255
  %v294 = vadd.f32 %v200, %v293
  %v295 = vld [vmem:[%s1 + $0x2] sm:$0x1]
  %v296 = vld [vmem:[%s1 + $0xa] sm:$0x1]
  %v297 = vld [vmem:[%s1 + $0x12] sm:$0x1]
  %v298 = vld [vmem:[%s1 + $0x1a] sm:$0x1]
  %v299 = vsub.f32 %v295, %v105
  %v300 = vsub.f32 %v296, %v108
  %v301 = vsub.f32 %v297, %v111
  %v302 = vmul.f32 %v299, %v299
  %v303 = vmul.f32 %v300, %v300
  %v304 = vadd.f32 %v302, %v303
  %v305 = vmul.f32 %v301, %v301
  %v306 = vadd.f32 %v304, %v305
  %vm307 = vcmp.gt.f32.partialorder %v298, 0.5
  %vm308 = vcmp.lt.f32.partialorder %v306, 14.221799
  %vm309 = vmand %vm307, %vm308
  %v310 = vsel %vm309, %v306, 3.5554497
  %v311 = vrsqrt.pop %v310
  %v312 = vmul.f32 %v311, %v310
  %v313 = vmul.f32 %v312, %v311
  %v314 = vmul.f32 0.5, %v313
  %v315 = vsub.f32 1.5, %v314
  %v316 = vmul.f32 %v311, %v315
  %vm317 = vweird.f32 %v310
  %vm318 = vweird.f32 %v311
  %vm319 = vmor %vm317, %vm318
  %v320 = vsel %vm319, %v311, %v316
  %v321 = vmul.f32 %v310, %v320
  %v322 = vsub.f32 %v321, 3.77118
  %v323 = vmin.f32 %v322, -0.001
  %v324 = vrcp.pop %v323
  %v325 = vmul.f32 %v323, %v324
  %v326 = vsub.f32 1.0, %v325
  %v327 = vmul.f32 %v324, %v326
  %v328 = vadd.f32 %v324, %v327
  %vm329 = vweird.f32 %v323
  %vm330 = vweird.f32 %v324
  %vm331 = vmor %vm329, %vm330
  %v332 = vsel %vm331, %v324, %v328
  %v333 = vand.u32 2147483647, %v323
  %vm334 = vcmp.eq.f32.partialorder %v333, 8.507059e+37
  %v335 = vand.u32 %v323, 2147483648
  %v336 = vor.u32 1.1754944e-38, %v335
  %v337 = vsel %vm334, %v336, %v332
  %v338 = vmul.f32 2.51412, %v337
  %v339 = vmul.f32 %v338, 1.442695
  %v340 = vpow.pop %v339
  %v341 = vsel %vm309, 1, 0
  %v342 = vcvt.s32.f32 %v341
  %v343 = vmul.f32 %v340, %v342
  %v344 = vperm.slane %v295, 0
  %v345 = vsub.f32 %v344, %v14
  %v346 = vperm.slane %v296, 0
  %v347 = vsub.f32 %v346, %v15
  %v348 = vperm.slane %v297, 0
  %v349 = vsub.f32 %v348, %v16
  %v350 = vmul.f32 %v345, %v345
  %v351 = vmul.f32 %v347, %v347
  %v352 = vadd.f32 %v350, %v351
  %v353 = vmul.f32 %v349, %v349
  %v354 = vadd.f32 %v352, %v353
  %v355 = vmul.f32 %v321, %v321
  %v356 = vperm.slane %v355, 0
  %v357 = vadd.f32 %v95, %v356
  %v358 = vsub.f32 %v357, %v354
  %v359 = vmul.f32 %v358, %v96
  %v360 = vperm.slane %v320, 0
  %v361 = vmul.f32 %v359, %v360
  %v362 = vsub.f32 %v361, -0.33333334
  %vm363 = vcmp.ne.s32.totalorder %v99, 2
  %v364 = vsel %vm363, 1, 0
  %v365 = vcvt.s32.f32 %v364
  %v366 = vmul.f32 %v362, 45.5322
  %v367 = vperm.slane %v343, 0
  %v368 = vmul.f32 %v94, %v367
  %v369 = vmul.f32 %v366, %v368
  %v370 = vmul.f32 %v369, %v365
  %v371 = vmul.f32 %v370, %v362
  %v372 = vadd.f32 %v278, %v371
  %v373 = vmul.f32 %v361, %v49
  %v374 = vsub.f32 %v360, %v373
  %v375 = vmul.f32 %v374, 2.0
  %v376 = vmul.f32 %v97, %v362
  %v377 = vsub.f32 %v375, %v376
  %v378 = vmul.f32 %v370, %v377
  %v379 = vadd.f32 %v285, %v378
  %v380 = vmul.f32 %v370, 2.0
  %v381 = vmul.f32 %v380, %v49
  %v382 = vmul.f32 %v381, %v360
  %v383 = vmul.f32 %v382, %v345
  %v384 = vadd.f32 %v290, %v383
  %v385 = vmul.f32 %v382, %v347
  %v386 = vadd.f32 %v292, %v385
  %v387 = vmul.f32 %v382, %v349
  %v388 = vadd.f32 %v294, %v387
  %v389 = vld [vmem:[%s1 + $0x3] sm:$0x1]
  %v390 = vld [vmem:[%s1 + $0xb] sm:$0x1]
  %v391 = vld [vmem:[%s1 + $0x13] sm:$0x1]
  %v392 = vld [vmem:[%s1 + $0x1b] sm:$0x1]
  %v393 = vsub.f32 %v389, %v105
  %v394 = vsub.f32 %v390, %v108
  %v395 = vsub.f32 %v391, %v111
  %v396 = vmul.f32 %v393, %v393
  %v397 = vmul.f32 %v394, %v394
  %v398 = vadd.f32 %v396, %v397
  %v399 = vmul.f32 %v395, %v395
  %v400 = vadd.f32 %v398, %v399
  %vm401 = vcmp.gt.f32.partialorder %v392, 0.5
  %vm402 = vcmp.lt.f32.partialorder %v400, 14.221799
  %vm403 = vmand %vm401, %vm402
  %v404 = vsel %vm403, %v400, 3.5554497
  %v405 = vrsqrt.pop %v404
  %v406 = vmul.f32 %v405, %v404
  %v407 = vmul.f32 %v406, %v405
  %v408 = vmul.f32 0.5, %v407
  %v409 = vsub.f32 1.5, %v408
  %v410 = vmul.f32 %v405, %v409
  %vm411 = vweird.f32 %v404
  %vm412 = vweird.f32 %v405
  %vm413 = vmor %vm411, %vm412
  %v414 = vsel %vm413, %v405, %v410
  %v415 = vmul.f32 %v404, %v414
  %v416 = vsub.f32 %v415, 3.77118
  %v417 = vmin.f32 %v416, -0.001
  %v418 = vrcp.pop %v417
  %v419 = vmul.f32 %v417, %v418
  %v420 = vsub.f32 1.0, %v419
  %v421 = vmul.f32 %v418, %v420
  %v422 = vadd.f32 %v418, %v421
  %vm423 = vweird.f32 %v417
  %vm424 = vweird.f32 %v418
  %vm425 = vmor %vm423, %vm424
  %v426 = vsel %vm425, %v418, %v422
  %v427 = vand.u32 2147483647, %v417
  %vm428 = vcmp.eq.f32.partialorder %v427, 8.507059e+37
  %v429 = vand.u32 %v417, 2147483648
  %v430 = vor.u32 1.1754944e-38, %v429
  %v431 = vsel %vm428, %v430, %v426
  %v432 = vmul.f32 2.51412, %v431
  %v433 = vmul.f32 %v432, 1.442695
  %v434 = vpow.pop %v433
  %v435 = vsel %vm403, 1, 0
  %v436 = vcvt.s32.f32 %v435
  %v437 = vmul.f32 %v434, %v436
  %v438 = vperm.slane %v389, 0
  %v439 = vsub.f32 %v438, %v14
  %v440 = vperm.slane %v390, 0
  %v441 = vsub.f32 %v440, %v15
  %v442 = vperm.slane %v391, 0
  %v443 = vsub.f32 %v442, %v16
  %v444 = vmul.f32 %v439, %v439
  %v445 = vmul.f32 %v441, %v441
  %v446 = vadd.f32 %v444, %v445
  %v447 = vmul.f32 %v443, %v443
  %v448 = vadd.f32 %v446, %v447
  %v449 = vmul.f32 %v415, %v415
  %v450 = vperm.slane %v449, 0
  %v451 = vadd.f32 %v95, %v450
  %v452 = vsub.f32 %v451, %v448
  %v453 = vmul.f32 %v452, %v96
  %v454 = vperm.slane %v414, 0
  %v455 = vmul.f32 %v453, %v454
  %v456 = vsub.f32 %v455, -0.33333334
  %vm457 = vcmp.ne.s32.totalorder %v99, 3
  %v458 = vsel %vm457, 1, 0
  %v459 = vcvt.s32.f32 %v458
  %v460 = vmul.f32 %v456, 45.5322
  %v461 = vperm.slane %v437, 0
  %v462 = vmul.f32 %v94, %v461
  %v463 = vmul.f32 %v460, %v462
  %v464 = vmul.f32 %v463, %v459
  %v465 = vmul.f32 %v464, %v456
  %v466 = vadd.f32 %v372, %v465
  %v467 = vmul.f32 %v455, %v49
  %v468 = vsub.f32 %v454, %v467
  %v469 = vmul.f32 %v468, 2.0
  %v470 = vmul.f32 %v97, %v456
  %v471 = vsub.f32 %v469, %v470
  %v472 = vmul.f32 %v464, %v471
  %v473 = vadd.f32 %v379, %v472
  %v474 = vmul.f32 %v464, 2.0
  %v475 = vmul.f32 %v474, %v49
  %v476 = vmul.f32 %v475, %v454
  %v477 = vmul.f32 %v476, %v439
  %v478 = vadd.f32 %v384, %v477
  %v479 = vmul.f32 %v476, %v441
  %v480 = vadd.f32 %v386, %v479
  %v481 = vmul.f32 %v476, %v443
  %v482 = vadd.f32 %v388, %v481
  %v483 = vld [vmem:[%s1 + $0x4] sm:$0x1]
  %v484 = vld [vmem:[%s1 + $0xc] sm:$0x1]
  %v485 = vld [vmem:[%s1 + $0x14] sm:$0x1]
  %v486 = vld [vmem:[%s1 + $0x1c] sm:$0x1]
  %v487 = vsub.f32 %v483, %v105
  %v488 = vsub.f32 %v484, %v108
  %v489 = vsub.f32 %v485, %v111
  %v490 = vmul.f32 %v487, %v487
  %v491 = vmul.f32 %v488, %v488
  %v492 = vadd.f32 %v490, %v491
  %v493 = vmul.f32 %v489, %v489
  %v494 = vadd.f32 %v492, %v493
  %vm495 = vcmp.gt.f32.partialorder %v486, 0.5
  %vm496 = vcmp.lt.f32.partialorder %v494, 14.221799
  %vm497 = vmand %vm495, %vm496
  %v498 = vsel %vm497, %v494, 3.5554497
  %v499 = vrsqrt.pop %v498
  %v500 = vmul.f32 %v499, %v498
  %v501 = vmul.f32 %v500, %v499
  %v502 = vmul.f32 0.5, %v501
  %v503 = vsub.f32 1.5, %v502
  %v504 = vmul.f32 %v499, %v503
  %vm505 = vweird.f32 %v498
  %vm506 = vweird.f32 %v499
  %vm507 = vmor %vm505, %vm506
  %v508 = vsel %vm507, %v499, %v504
  %v509 = vmul.f32 %v498, %v508
  %v510 = vsub.f32 %v509, 3.77118
  %v511 = vmin.f32 %v510, -0.001
  %v512 = vrcp.pop %v511
  %v513 = vmul.f32 %v511, %v512
  %v514 = vsub.f32 1.0, %v513
  %v515 = vmul.f32 %v512, %v514
  %v516 = vadd.f32 %v512, %v515
  %vm517 = vweird.f32 %v511
  %vm518 = vweird.f32 %v512
  %vm519 = vmor %vm517, %vm518
  %v520 = vsel %vm519, %v512, %v516
  %v521 = vand.u32 2147483647, %v511
  %vm522 = vcmp.eq.f32.partialorder %v521, 8.507059e+37
  %v523 = vand.u32 %v511, 2147483648
  %v524 = vor.u32 1.1754944e-38, %v523
  %v525 = vsel %vm522, %v524, %v520
  %v526 = vmul.f32 2.51412, %v525
  %v527 = vmul.f32 %v526, 1.442695
  %v528 = vpow.pop %v527
  %v529 = vsel %vm497, 1, 0
  %v530 = vcvt.s32.f32 %v529
  %v531 = vmul.f32 %v528, %v530
  %v532 = vperm.slane %v483, 0
  %v533 = vsub.f32 %v532, %v14
  %v534 = vperm.slane %v484, 0
  %v535 = vsub.f32 %v534, %v15
  %v536 = vperm.slane %v485, 0
  %v537 = vsub.f32 %v536, %v16
  %v538 = vmul.f32 %v533, %v533
  %v539 = vmul.f32 %v535, %v535
  %v540 = vadd.f32 %v538, %v539
  %v541 = vmul.f32 %v537, %v537
  %v542 = vadd.f32 %v540, %v541
  %v543 = vmul.f32 %v509, %v509
  %v544 = vperm.slane %v543, 0
  %v545 = vadd.f32 %v95, %v544
  %v546 = vsub.f32 %v545, %v542
  %v547 = vmul.f32 %v546, %v96
  %v548 = vperm.slane %v508, 0
  %v549 = vmul.f32 %v547, %v548
  %v550 = vsub.f32 %v549, -0.33333334
  %vm551 = vcmp.ne.s32.totalorder %v99, 4
  %v552 = vsel %vm551, 1, 0
  %v553 = vcvt.s32.f32 %v552
  %v554 = vmul.f32 %v550, 45.5322
  %v555 = vperm.slane %v531, 0
  %v556 = vmul.f32 %v94, %v555
  %v557 = vmul.f32 %v554, %v556
  %v558 = vmul.f32 %v557, %v553
  %v559 = vmul.f32 %v558, %v550
  %v560 = vadd.f32 %v466, %v559
  %v561 = vmul.f32 %v549, %v49
  %v562 = vsub.f32 %v548, %v561
  %v563 = vmul.f32 %v562, 2.0
  %v564 = vmul.f32 %v97, %v550
  %v565 = vsub.f32 %v563, %v564
  %v566 = vmul.f32 %v558, %v565
  %v567 = vadd.f32 %v473, %v566
  %v568 = vmul.f32 %v558, 2.0
  %v569 = vmul.f32 %v568, %v49
  %v570 = vmul.f32 %v569, %v548
  %v571 = vmul.f32 %v570, %v533
  %v572 = vadd.f32 %v478, %v571
  %v573 = vmul.f32 %v570, %v535
  %v574 = vadd.f32 %v480, %v573
  %v575 = vmul.f32 %v570, %v537
  %v576 = vadd.f32 %v482, %v575
  %v577 = vld [vmem:[%s1 + $0x5] sm:$0x1]
  %v578 = vld [vmem:[%s1 + $0xd] sm:$0x1]
  %v579 = vld [vmem:[%s1 + $0x15] sm:$0x1]
  %v580 = vld [vmem:[%s1 + $0x1d] sm:$0x1]
  %v581 = vsub.f32 %v577, %v105
  %v582 = vsub.f32 %v578, %v108
  %v583 = vsub.f32 %v579, %v111
  %v584 = vmul.f32 %v581, %v581
  %v585 = vmul.f32 %v582, %v582
  %v586 = vadd.f32 %v584, %v585
  %v587 = vmul.f32 %v583, %v583
  %v588 = vadd.f32 %v586, %v587
  %vm589 = vcmp.gt.f32.partialorder %v580, 0.5
  %vm590 = vcmp.lt.f32.partialorder %v588, 14.221799
  %vm591 = vmand %vm589, %vm590
  %v592 = vsel %vm591, %v588, 3.5554497
  %v593 = vrsqrt.pop %v592
  %v594 = vmul.f32 %v593, %v592
  %v595 = vmul.f32 %v594, %v593
  %v596 = vmul.f32 0.5, %v595
  %v597 = vsub.f32 1.5, %v596
  %v598 = vmul.f32 %v593, %v597
  %vm599 = vweird.f32 %v592
  %vm600 = vweird.f32 %v593
  %vm601 = vmor %vm599, %vm600
  %v602 = vsel %vm601, %v593, %v598
  %v603 = vmul.f32 %v592, %v602
  %v604 = vsub.f32 %v603, 3.77118
  %v605 = vmin.f32 %v604, -0.001
  %v606 = vrcp.pop %v605
  %v607 = vmul.f32 %v605, %v606
  %v608 = vsub.f32 1.0, %v607
  %v609 = vmul.f32 %v606, %v608
  %v610 = vadd.f32 %v606, %v609
  %vm611 = vweird.f32 %v605
  %vm612 = vweird.f32 %v606
  %vm613 = vmor %vm611, %vm612
  %v614 = vsel %vm613, %v606, %v610
  %v615 = vand.u32 2147483647, %v605
  %vm616 = vcmp.eq.f32.partialorder %v615, 8.507059e+37
  %v617 = vand.u32 %v605, 2147483648
  %v618 = vor.u32 1.1754944e-38, %v617
  %v619 = vsel %vm616, %v618, %v614
  %v620 = vmul.f32 2.51412, %v619
  %v621 = vmul.f32 %v620, 1.442695
  %v622 = vpow.pop %v621
  %v623 = vsel %vm591, 1, 0
  %v624 = vcvt.s32.f32 %v623
  %v625 = vmul.f32 %v622, %v624
  %v626 = vperm.slane %v577, 0
  %v627 = vsub.f32 %v626, %v14
  %v628 = vperm.slane %v578, 0
  %v629 = vsub.f32 %v628, %v15
  %v630 = vperm.slane %v579, 0
  %v631 = vsub.f32 %v630, %v16
  %v632 = vmul.f32 %v627, %v627
  %v633 = vmul.f32 %v629, %v629
  %v634 = vadd.f32 %v632, %v633
  %v635 = vmul.f32 %v631, %v631
  %v636 = vadd.f32 %v634, %v635
  %v637 = vmul.f32 %v603, %v603
  %v638 = vperm.slane %v637, 0
  %v639 = vadd.f32 %v95, %v638
  %v640 = vsub.f32 %v639, %v636
  %v641 = vmul.f32 %v640, %v96
  %v642 = vperm.slane %v602, 0
  %v643 = vmul.f32 %v641, %v642
  %v644 = vsub.f32 %v643, -0.33333334
  %vm645 = vcmp.ne.s32.totalorder %v99, 5
  %v646 = vsel %vm645, 1, 0
  %v647 = vcvt.s32.f32 %v646
  %v648 = vmul.f32 %v644, 45.5322
  %v649 = vperm.slane %v625, 0
  %v650 = vmul.f32 %v94, %v649
  %v651 = vmul.f32 %v648, %v650
  %v652 = vmul.f32 %v651, %v647
  %v653 = vmul.f32 %v652, %v644
  %v654 = vadd.f32 %v560, %v653
  %v655 = vmul.f32 %v643, %v49
  %v656 = vsub.f32 %v642, %v655
  %v657 = vmul.f32 %v656, 2.0
  %v658 = vmul.f32 %v97, %v644
  %v659 = vsub.f32 %v657, %v658
  %v660 = vmul.f32 %v652, %v659
  %v661 = vadd.f32 %v567, %v660
  %v662 = vmul.f32 %v652, 2.0
  %v663 = vmul.f32 %v662, %v49
  %v664 = vmul.f32 %v663, %v642
  %v665 = vmul.f32 %v664, %v627
  %v666 = vadd.f32 %v572, %v665
  %v667 = vmul.f32 %v664, %v629
  %v668 = vadd.f32 %v574, %v667
  %v669 = vmul.f32 %v664, %v631
  %v670 = vadd.f32 %v576, %v669
  %v671 = vld [vmem:[%s1 + $0x6] sm:$0x1]
  %v672 = vld [vmem:[%s1 + $0xe] sm:$0x1]
  %v673 = vld [vmem:[%s1 + $0x16] sm:$0x1]
  %v674 = vld [vmem:[%s1 + $0x1e] sm:$0x1]
  %v675 = vsub.f32 %v671, %v105
  %v676 = vsub.f32 %v672, %v108
  %v677 = vsub.f32 %v673, %v111
  %v678 = vmul.f32 %v675, %v675
  %v679 = vmul.f32 %v676, %v676
  %v680 = vadd.f32 %v678, %v679
  %v681 = vmul.f32 %v677, %v677
  %v682 = vadd.f32 %v680, %v681
  %vm683 = vcmp.gt.f32.partialorder %v674, 0.5
  %vm684 = vcmp.lt.f32.partialorder %v682, 14.221799
  %vm685 = vmand %vm683, %vm684
  %v686 = vsel %vm685, %v682, 3.5554497
  %v687 = vrsqrt.pop %v686
  %v688 = vmul.f32 %v687, %v686
  %v689 = vmul.f32 %v688, %v687
  %v690 = vmul.f32 0.5, %v689
  %v691 = vsub.f32 1.5, %v690
  %v692 = vmul.f32 %v687, %v691
  %vm693 = vweird.f32 %v686
  %vm694 = vweird.f32 %v687
  %vm695 = vmor %vm693, %vm694
  %v696 = vsel %vm695, %v687, %v692
  %v697 = vmul.f32 %v686, %v696
  %v698 = vsub.f32 %v697, 3.77118
  %v699 = vmin.f32 %v698, -0.001
  %v700 = vrcp.pop %v699
  %v701 = vmul.f32 %v699, %v700
  %v702 = vsub.f32 1.0, %v701
  %v703 = vmul.f32 %v700, %v702
  %v704 = vadd.f32 %v700, %v703
  %vm705 = vweird.f32 %v699
  %vm706 = vweird.f32 %v700
  %vm707 = vmor %vm705, %vm706
  %v708 = vsel %vm707, %v700, %v704
  %v709 = vand.u32 2147483647, %v699
  %vm710 = vcmp.eq.f32.partialorder %v709, 8.507059e+37
  %v711 = vand.u32 %v699, 2147483648
  %v712 = vor.u32 1.1754944e-38, %v711
  %v713 = vsel %vm710, %v712, %v708
  %v714 = vmul.f32 2.51412, %v713
  %v715 = vmul.f32 %v714, 1.442695
  %v716 = vpow.pop %v715
  %v717 = vsel %vm685, 1, 0
  %v718 = vcvt.s32.f32 %v717
  %v719 = vmul.f32 %v716, %v718
  %v720 = vperm.slane %v671, 0
  %v721 = vsub.f32 %v720, %v14
  %v722 = vperm.slane %v672, 0
  %v723 = vsub.f32 %v722, %v15
  %v724 = vperm.slane %v673, 0
  %v725 = vsub.f32 %v724, %v16
  %v726 = vmul.f32 %v721, %v721
  %v727 = vmul.f32 %v723, %v723
  %v728 = vadd.f32 %v726, %v727
  %v729 = vmul.f32 %v725, %v725
  %v730 = vadd.f32 %v728, %v729
  %v731 = vmul.f32 %v697, %v697
  %v732 = vperm.slane %v731, 0
  %v733 = vadd.f32 %v95, %v732
  %v734 = vsub.f32 %v733, %v730
  %v735 = vmul.f32 %v734, %v96
  %v736 = vperm.slane %v696, 0
  %v737 = vmul.f32 %v735, %v736
  %v738 = vsub.f32 %v737, -0.33333334
  %vm739 = vcmp.ne.s32.totalorder %v99, 6
  %v740 = vsel %vm739, 1, 0
  %v741 = vcvt.s32.f32 %v740
  %v742 = vmul.f32 %v738, 45.5322
  %v743 = vperm.slane %v719, 0
  %v744 = vmul.f32 %v94, %v743
  %v745 = vmul.f32 %v742, %v744
  %v746 = vmul.f32 %v745, %v741
  %v747 = vmul.f32 %v746, %v738
  %v748 = vadd.f32 %v654, %v747
  %v749 = vmul.f32 %v737, %v49
  %v750 = vsub.f32 %v736, %v749
  %v751 = vmul.f32 %v750, 2.0
  %v752 = vmul.f32 %v97, %v738
  %v753 = vsub.f32 %v751, %v752
  %v754 = vmul.f32 %v746, %v753
  %v755 = vadd.f32 %v661, %v754
  %v756 = vmul.f32 %v746, 2.0
  %v757 = vmul.f32 %v756, %v49
  %v758 = vmul.f32 %v757, %v736
  %v759 = vmul.f32 %v758, %v721
  %v760 = vadd.f32 %v666, %v759
  %v761 = vmul.f32 %v758, %v723
  %v762 = vadd.f32 %v668, %v761
  %v763 = vmul.f32 %v758, %v725
  %v764 = vadd.f32 %v670, %v763
  %v765 = vld [vmem:[%s1 + $0x7] sm:$0x1]
  %v766 = vld [vmem:[%s1 + $0xf] sm:$0x1]
  %v767 = vld [vmem:[%s1 + $0x17] sm:$0x1]
  %v768 = vld [vmem:[%s1 + $0x1f] sm:$0x1]
  %v769 = vsub.f32 %v765, %v105
  %v770 = vsub.f32 %v766, %v108
  %v771 = vsub.f32 %v767, %v111
  %v772 = vmul.f32 %v769, %v769
  %v773 = vmul.f32 %v770, %v770
  %v774 = vadd.f32 %v772, %v773
  %v775 = vmul.f32 %v771, %v771
  %v776 = vadd.f32 %v774, %v775
  %vm777 = vcmp.gt.f32.partialorder %v768, 0.5
  %vm778 = vcmp.lt.f32.partialorder %v776, 14.221799
  %vm779 = vmand %vm777, %vm778
  %v780 = vsel %vm779, %v776, 3.5554497
  %v781 = vrsqrt.pop %v780
  %v782 = vmul.f32 %v781, %v780
  %v783 = vmul.f32 %v782, %v781
  %v784 = vmul.f32 0.5, %v783
  %v785 = vsub.f32 1.5, %v784
  %v786 = vmul.f32 %v781, %v785
  %vm787 = vweird.f32 %v780
  %vm788 = vweird.f32 %v781
  %vm789 = vmor %vm787, %vm788
  %v790 = vsel %vm789, %v781, %v786
  %v791 = vmul.f32 %v780, %v790
  %v792 = vsub.f32 %v791, 3.77118
  %v793 = vmin.f32 %v792, -0.001
  %v794 = vrcp.pop %v793
  %v795 = vmul.f32 %v793, %v794
  %v796 = vsub.f32 1.0, %v795
  %v797 = vmul.f32 %v794, %v796
  %v798 = vadd.f32 %v794, %v797
  %vm799 = vweird.f32 %v793
  %vm800 = vweird.f32 %v794
  %vm801 = vmor %vm799, %vm800
  %v802 = vsel %vm801, %v794, %v798
  %v803 = vand.u32 2147483647, %v793
  %vm804 = vcmp.eq.f32.partialorder %v803, 8.507059e+37
  %v805 = vand.u32 %v793, 2147483648
  %v806 = vor.u32 1.1754944e-38, %v805
  %v807 = vsel %vm804, %v806, %v802
  %v808 = vmul.f32 2.51412, %v807
  %v809 = vmul.f32 %v808, 1.442695
  %v810 = vpow.pop %v809
  %v811 = vsel %vm779, 1, 0
  %v812 = vcvt.s32.f32 %v811
  %v813 = vmul.f32 %v810, %v812
  %v814 = vperm.slane %v765, 0
  %v815 = vsub.f32 %v814, %v14
  %v816 = vperm.slane %v766, 0
  %v817 = vsub.f32 %v816, %v15
  %v818 = vperm.slane %v767, 0
  %v819 = vsub.f32 %v818, %v16
  %v820 = vmul.f32 %v815, %v815
  %v821 = vmul.f32 %v817, %v817
  %v822 = vadd.f32 %v820, %v821
  %v823 = vmul.f32 %v819, %v819
  %v824 = vadd.f32 %v822, %v823
  %v825 = vmul.f32 %v791, %v791
  %v826 = vperm.slane %v825, 0
  %v827 = vadd.f32 %v95, %v826
  %v828 = vsub.f32 %v827, %v824
  %v829 = vmul.f32 %v828, %v96
  %v830 = vperm.slane %v790, 0
  %v831 = vmul.f32 %v829, %v830
  %v832 = vsub.f32 %v831, -0.33333334
  %vm833 = vcmp.ne.s32.totalorder %v99, 7
  %v834 = vsel %vm833, 1, 0
  %v835 = vcvt.s32.f32 %v834
  %v836 = vmul.f32 %v832, 45.5322
  %v837 = vperm.slane %v813, 0
  %v838 = vmul.f32 %v94, %v837
  %v839 = vmul.f32 %v836, %v838
  %v840 = vmul.f32 %v839, %v835
  %v841 = vmul.f32 %v840, %v832
  %v842 = vadd.f32 %v748, %v841
  %v843 = vmul.f32 %v831, %v49
  %v844 = vsub.f32 %v830, %v843
  %v845 = vmul.f32 %v844, 2.0
  %v846 = vmul.f32 %v97, %v832
  %v847 = vsub.f32 %v845, %v846
  %v848 = vmul.f32 %v840, %v847
  %v849 = vadd.f32 %v755, %v848
  %v850 = vmul.f32 %v840, 2.0
  %v851 = vmul.f32 %v850, %v49
  %v852 = vmul.f32 %v851, %v830
  %v853 = vmul.f32 %v852, %v815
  %v854 = vadd.f32 %v760, %v853
  %v855 = vmul.f32 %v852, %v817
  %v856 = vadd.f32 %v762, %v855
  %v857 = vmul.f32 %v852, %v819
  %v858 = vadd.f32 %v764, %v857
  %v859 = vmul.f32 %v90, 0.5
  %v860 = vadd.f32 %v859, %v849
  %v861 = vmul.f32 %v860, %v51
  %v862 = vadd.f32 %v861, %v854
  %v863 = vmul.f32 %v860, %v52
  %v864 = vadd.f32 %v863, %v856
  %v865 = vmul.f32 %v860, %v53
  %v866 = vadd.f32 %v865, %v858
  %v867 = vrot.slane %v861, 4
  %v868 = vadd.f32 %v861, %v867
  %v869 = vrot.slane %v868, 2
  %v870 = vadd.f32 %v868, %v869
  %v871 = vrot.slane %v870, 1
  %v872 = vadd.f32 %v870, %v871
  %v873 = vrot.slane %v863, 4
  %v874 = vadd.f32 %v863, %v873
  %v875 = vrot.slane %v874, 2
  %v876 = vadd.f32 %v874, %v875
  %v877 = vrot.slane %v876, 1
  %v878 = vadd.f32 %v876, %v877
  %v879 = vrot.slane %v865, 4
  %v880 = vadd.f32 %v865, %v879
  %v881 = vrot.slane %v880, 2
  %v882 = vadd.f32 %v880, %v881
  %v883 = vrot.slane %v882, 1
  %v884 = vadd.f32 %v882, %v883
  %v885 = vrot.slane %v81, 4
  %v886 = vadd.f32 %v81, %v885
  %v887 = vrot.slane %v886, 2
  %v888 = vadd.f32 %v886, %v887
  %v889 = vrot.slane %v888, 1
  %v890 = vadd.f32 %v888, %v889
  %v891 = vrot.slane %v842, 4
  %v892 = vadd.f32 %v842, %v891
  %v893 = vrot.slane %v892, 2
  %v894 = vadd.f32 %v892, %v893
  %v895 = vrot.slane %v894, 1
  %v896 = vadd.f32 %v894, %v895
  %v897 = vadd.f32 %v890, %v896
  %v898 = vmul.f32 %v897, 0.5
  %vm899 = vcmask 1040384
  %v900 = vsel %vm899, %v872, %v878
  %vm901 = vcmask 1041408
  %v902 = vsel %vm901, %v900, %v884
  %vm903 = vcmask 1042432
  %v904 = vsel %vm903, %v902, %v898
  %vm905 = vcmask 1043456
  %v906 = vsel %vm905, %v904, 0.0
  %907 = vst [vmem:[%s2] sm:$0xff] %v906
  %v908 = vsub.f32 0.0, %v862
  %909 = vst [vmem:[%s3] sm:$0xff] %v908
  %v910 = vsub.f32 0.0, %v864
  %911 = vst [vmem:[%s3 + $0x8] sm:$0xff] %v910
  %v912 = vsub.f32 0.0, %v866
  %913 = vst [vmem:[%s3 + $0x10] sm:$0xff] %v912
  // Predicated region
  $region10: #{sw_forward.1} parent=0 // pred_check
    _
  $region11: #{sw_forward.1} parent=0 // pred_check_branch
    %915 = sbr.rel (0) target = $region13
  $region12: #{sw_forward.1} parent=0 // pred_region
    _
  $region13: #{sw_forward.1} parent=0 // pred_fallthru
    _
  // Predicated region
  $region14: #{sw_forward.1} parent=0 // pred_check
    _
  $region15: #{sw_forward.1} parent=0 // pred_check_branch
    %917 = sbr.rel (0) target = $region17
  $region16: #{sw_forward.1} parent=0 // pred_region
    _
  $region17: #{sw_forward.1} parent=0 // pred_fallthru
    _
  // Predicated region
  $region18: #{sw_forward.1} parent=0 // pred_check
    _
  $region19: #{sw_forward.1} parent=0 // pred_check_branch
    %919 = sbr.rel (0) target = $region21
  $region20: #{sw_forward.1} parent=0 // pred_region
    _
  $region21: #{sw_forward.1} parent=0 // pred_fallthru
    _
  // Predicated region
  $region22: #{sw_forward.1} parent=0 // pred_check
    _
  $region23: #{sw_forward.1} parent=0 // pred_check_branch
    %921 = sbr.rel (0) target = $region25
  $region24: #{sw_forward.1} parent=0 // pred_region
    _
  $region25: #{sw_forward.1} parent=0 // pred_fallthru
    _

</llo_original>
